<compile_context>
chip_gen: v7x
topology: tpu7x:2x2x1
jax: 0.10.0
libtpu: 0.0.40
codegen_flags: <defaults>
</compile_context>

<pallas_src>
import functools

import jax
import jax.numpy as jnp
from jax import lax
from jax.experimental import pallas as pl
from jax.experimental.pallas import tpu as pltpu


# ---------------------------------------------------------------------------
# small helpers
# ---------------------------------------------------------------------------
def _round_up(n, m):
    return ((n + m - 1) // m) * m


def _divisor_tile(n, target=512):
    """Largest of {512,256,128} that divides n (<= target), else full extent."""
    for cand in (512, 256, 128):
        if cand <= target and n % cand == 0:
            return cand
    return n


def _seq_tile(t, target=256):
    """Padded length + tile for a sequence axis (tile always multiple of 8)."""
    tp = _round_up(t, 8)
    tile = min(target, tp)
    tp = _round_up(tp, tile)
    return tp, tile


def _pick_head_group(bh, max_group=8):
    """Heads per grid step: divisor of bh, <= max_group, keep >=2 groups."""
    best = 1
    for g in range(1, min(bh, max_group) + 1):
        if bh % g == 0:
            best = g
    if bh // best < 2:
        for g in range(best, 0, -1):
            if bh % g == 0 and bh // g >= 2:
                return g
    return best


def _vmem_limit_bytes(need):
    """Scoped-VMEM limit sized from the tile footprint (v7x-safe cap)."""
    return int(min(max(2 * need + (4 << 20), 16 << 20), 64 << 20))


# ---------------------------------------------------------------------------
# Tiled linear projection kernels (stages 1 and 3): M x N x K accumulator
# ---------------------------------------------------------------------------
def _matmul_kernel(x_ref, w_ref, o_ref, acc_ref, *, mxu_dtype):
    kk = pl.program_id(2)

    @pl.when(kk == 0)
    def _():
        acc_ref[...] = jnp.zeros_like(acc_ref)

    acc_ref[...] += jnp.dot(
        x_ref[...].astype(mxu_dtype),
        w_ref[...].astype(mxu_dtype),
        preferred_element_type=jnp.float32,
    )

    @pl.when(kk == pl.num_programs(2) - 1)
    def _():
        o_ref[...] = acc_ref[...].astype(o_ref.dtype)


def _matmul_bias_kernel(x_ref, w_ref, b_ref, o_ref, acc_ref, *, mxu_dtype):
    kk = pl.program_id(2)

    @pl.when(kk == 0)
    def _():
        acc_ref[...] = jnp.zeros_like(acc_ref)

    acc_ref[...] += jnp.dot(
        x_ref[...].astype(mxu_dtype),
        w_ref[...].astype(mxu_dtype),
        preferred_element_type=jnp.float32,
    )

    @pl.when(kk == pl.num_programs(2) - 1)
    def _():
        o_ref[...] = (acc_ref[...] + b_ref[...].astype(jnp.float32)).astype(o_ref.dtype)


def _linear(x2, w, b=None, *, row_tile=512, mxu_dtype=None):
    """x2: (rows, K); w: (K, N); b: (1, N) or None  ->  (rows, N)."""
    rows, k_dim = x2.shape
    n_dim = w.shape[1]
    if mxu_dtype is None:
        mxu_dtype = x2.dtype

    # Row padding instead of full-extent fallback; padded rows are sliced off.
    mp = _round_up(rows, 8)
    tm = min(row_tile, mp)
    mp = _round_up(mp, tm)
    if mp != rows:
        x2 = jnp.pad(x2, ((0, mp - rows), (0, 0)))

    tn = _divisor_tile(n_dim)
    tkk = _divisor_tile(k_dim)
    grid = (mp // tm, n_dim // tn, k_dim // tkk)

    itemsize = jnp.dtype(x2.dtype).itemsize
    cost = pl.CostEstimate(
        flops=2 * mp * k_dim * n_dim,
        transcendentals=0,
        bytes_accessed=itemsize
        * (mp * k_dim * (n_dim // tn) + k_dim * n_dim * (mp // tm) + mp * n_dim),
    )
    need = (
        2 * itemsize * (tm * tkk + tkk * tn + tm * tn)  # double-buffered blocks
        + 4 * tm * tn                                    # f32 accumulator
        + (2 * itemsize * tn if b is not None else 0)
    )
    params = pltpu.CompilerParams(
        dimension_semantics=("parallel", "parallel", "arbitrary"),
        vmem_limit_bytes=_vmem_limit_bytes(need),
    )
    common = dict(
        out_shape=jax.ShapeDtypeStruct((mp, n_dim), x2.dtype),
        grid=grid,
        out_specs=pl.BlockSpec((tm, tn), lambda i, j, kk: (i, j)),
        scratch_shapes=[pltpu.VMEM((tm, tn), jnp.float32)],
        compiler_params=params,
        cost_estimate=cost,
    )
    x_spec = pl.BlockSpec((tm, tkk), lambda i, j, kk: (i, kk))
    w_spec = pl.BlockSpec((tkk, tn), lambda i, j, kk: (kk, j))

    if b is None:
        out = pl.pallas_call(
            functools.partial(_matmul_kernel, mxu_dtype=mxu_dtype),
            in_specs=[x_spec, w_spec],
            **common,
        )(x2, w)
    else:
        b_spec = pl.BlockSpec((1, tn), lambda i, j, kk: (0, j))
        out = pl.pallas_call(
            functools.partial(_matmul_bias_kernel, mxu_dtype=mxu_dtype),
            in_specs=[x_spec, w_spec, b_spec],
            **common,
        )(x2, w, b)
    return out[:rows] if mp != rows else out


# ---------------------------------------------------------------------------
# Flash-attention core (stage 2): online softmax, head-group per grid step
# ---------------------------------------------------------------------------
def _flash_kernel(
    q_ref, k_ref, v_ref, o_ref, m_sc, l_sc, acc_sc,
    *, scale, kv_len, tk, need_mask, mxu_dtype,
):
    ki = pl.program_id(2)

    @pl.when(ki == 0)
    def _():
        m_sc[...] = jnp.full_like(m_sc, -jnp.inf)
        l_sc[...] = jnp.zeros_like(l_sc)
        acc_sc[...] = jnp.zeros_like(acc_sc)

    # Fold the softmax scale into Q (tq*Dh mults, not tq*tk).
    q = (q_ref[...] * scale).astype(mxu_dtype)   # (Hg, tq, Dh)
    k = k_ref[...].astype(mxu_dtype)             # (Hg, tk, Dh)

    s = jnp.einsum(
        "hqd,hkd->hqk", q, k, preferred_element_type=jnp.float32
    )  # (Hg, tq, tk)

    if need_mask:
        # Mask padded key positions (sequence padded up to the tile).
        kpos = ki * tk + lax.broadcasted_iota(jnp.int32, (1, 1, tk), 2)
        s = jnp.where(kpos < kv_len, s, -jnp.inf)

    # NOTE: causal mask intentionally NOT applied -- the reference uses the
    # non-in-place masked_fill and drops its result (spec bug reproduced).

    m_prev = m_sc[...]
    m_new = jnp.maximum(m_prev, jnp.max(s, axis=-1, keepdims=True))
    alpha = jnp.exp(m_prev - m_new)
    p = jnp.exp(s - m_new)
    l_sc[...] = alpha * l_sc[...] + jnp.sum(p, axis=-1, keepdims=True)
    acc_sc[...] = alpha * acc_sc[...] + jnp.einsum(
        "hqk,hkd->hqd",
        p.astype(mxu_dtype),
        v_ref[...].astype(mxu_dtype),
        preferred_element_type=jnp.float32,
    )
    m_sc[...] = m_new

    # TODO(synk): train-mode dropout on the attention weights not implemented
    # (eval-mode identity, matching nn.Dropout at inference).

    @pl.when(ki == pl.num_programs(2) - 1)
    def _():
        inv_l = pl.reciprocal(l_sc[...], approx=True)  # EUP, not a VALU divide
        o_ref[...] = (acc_sc[...] * inv_l).astype(o_ref.dtype)


def _flash_attention(q, k, v, *, seq_tile=256, mxu_dtype=None):
    """q, k, v: (B*H, T, Dh) head-major  ->  context (B*H, T, Dh)."""
    bh, t, dh = q.shape
    if mxu_dtype is None:
        mxu_dtype = q.dtype

    tp, tile = _seq_tile(t, seq_tile)
    tq = tk = tile
    if tp != t:  # pad sequence; padded keys masked in-kernel, queries sliced off
        pad = ((0, 0), (0, tp - t), (0, 0))
        q, k, v = jnp.pad(q, pad), jnp.pad(k, pad), jnp.pad(v, pad)

    hg = _pick_head_group(bh)
    grid = (bh // hg, tp // tq, tp // tk)
    scale = 1.0 / (dh**0.5)

    kernel = functools.partial(
        _flash_kernel,
        scale=scale, kv_len=t, tk=tk, need_mask=(tp != t), mxu_dtype=mxu_dtype,
    )

    itemsize = jnp.dtype(q.dtype).itemsize
    cost = pl.CostEstimate(
        flops=4 * bh * tp * tp * dh,
        transcendentals=bh * tp * tp,
        # Q read + O write once; K and V re-streamed once per q-tile.
        bytes_accessed=itemsize * bh * tp * dh * (2 + 2 * (tp // tq)),
    )
    need = (
        2 * itemsize * hg * dh * (2 * tq + 2 * tk)  # double-buffered q/k/v/o blocks
        + 4 * hg * tq * (dh + 2)                    # f32 m/l/acc scratch
    )
    out = pl.pallas_call(
        kernel,
        out_shape=jax.ShapeDtypeStruct((bh, tp, dh), q.dtype),
        grid=grid,
        in_specs=[
            pl.BlockSpec((hg, tq, dh), lambda g, qi, ki: (g, qi, 0)),
            pl.BlockSpec((hg, tk, dh), lambda g, qi, ki: (g, ki, 0)),
            pl.BlockSpec((hg, tk, dh), lambda g, qi, ki: (g, ki, 0)),
        ],
        out_specs=pl.BlockSpec((hg, tq, dh), lambda g, qi, ki: (g, qi, 0)),
        scratch_shapes=[
            pltpu.VMEM((hg, tq, 1), jnp.float32),   # running max  m
            pltpu.VMEM((hg, tq, 1), jnp.float32),   # running sum  l
            pltpu.VMEM((hg, tq, dh), jnp.float32),  # running acc
        ],
        compiler_params=pltpu.CompilerParams(
            dimension_semantics=("parallel", "parallel", "arbitrary"),
            vmem_limit_bytes=_vmem_limit_bytes(need),
        ),
        cost_estimate=cost,
    )(q, k, v)
    return out[:, :t, :] if tp != t else out


# ---------------------------------------------------------------------------
# Full forward pass
# ---------------------------------------------------------------------------
def efficient_mha(x, w_qkv, wo_t, bo, *, num_heads, mxu_dtype=None,
                  seq_tile=256, row_tile=512):
    """x: (B, T, D_in); w_qkv: (D_in, 3*D_out) pre-fused; wo_t: (D_out, D_out);
    bo: (1, D_out)."""
    B, T, D_in = x.shape
    D_out = w_qkv.shape[1] // 3
    Dh = D_out // num_heads

    # Stage 1: fused QKV projection -- single tiled MXU pass over B*T rows.
    x2 = x.reshape(B * T, D_in)
    qkv = _linear(x2, w_qkv, row_tile=row_tile, mxu_dtype=mxu_dtype)  # (B*T, 3*D_out)
    q, k, v = jnp.split(qkv, 3, axis=-1)

    # Layout plumbing only (no compute): head-major (B*H, T, Dh).
    def to_heads(t_):
        return (
            t_.reshape(B, T, num_heads, Dh)
            .transpose(0, 2, 1, 3)
            .reshape(B * num_heads, T, Dh)
        )

    qh, kh, vh = to_heads(q), to_heads(k), to_heads(v)

    # Stage 2: flash attention core.
    ctx = _flash_attention(qh, kh, vh, seq_tile=seq_tile, mxu_dtype=mxu_dtype)

    # Stage 3: merge heads + output projection.
    ctx = (
        ctx.reshape(B, num_heads, T, Dh)
        .transpose(0, 2, 1, 3)
        .reshape(B * T, D_out)
    )
    out = _linear(ctx, wo_t, bo, row_tile=row_tile, mxu_dtype=mxu_dtype)
    return out.reshape(B, T, D_out)


# ---------------------------------------------------------------------------
# Pure-JAX reference (mirrors the PyTorch forward, incl. the dropped mask)
# ---------------------------------------------------------------------------
def _reference(x, wq_t, wk_t, wv_t, wo_t, bo, num_heads):
    B, T, D_in = x.shape
    D_out = wq_t.shape[1]
    Dh = D_out // num_heads
    q = (x @ wq_t).reshape(B, T, num_heads, Dh).transpose(0, 2, 1, 3)
    k = (x @ wk_t).reshape(B, T, num_heads, Dh).transpose(0, 2, 1, 3)
    v = (x @ wv_t).reshape(B, T, num_heads, Dh).transpose(0, 2, 1, 3)
    s = jnp.einsum("bhqd,bhkd->bhqk", q, k) / (Dh**0.5)
    a = jax.nn.softmax(s, axis=-1)
    ctx = jnp.einsum("bhqk,bhkd->bhqd", a, v).transpose(0, 2, 1, 3).reshape(B, T, D_out)
    return ctx @ wo_t + bo


if __name__ == "__main__":
    in_dim, out_dim, num_heads = 32, 32, 2

    key = jax.random.PRNGKey(0)
    kx, kx2, kq, kk, kv, ko, kb = jax.random.split(key, 7)

    # PyTorch Linear-style uniform +/- 1/sqrt(fan_in); weights stored (fan_in, fan_out).
    bound_in = 1.0 / (in_dim**0.5)
    bound_out = 1.0 / (out_dim**0.5)
    wq_t = jax.random.uniform(kq, (in_dim, out_dim), jnp.float32, -bound_in, bound_in)
    wk_t = jax.random.uniform(kk, (in_dim, out_dim), jnp.float32, -bound_in, bound_in)
    wv_t = jax.random.uniform(kv, (in_dim, out_dim), jnp.float32, -bound_in, bound_in)
    wo_t = jax.random.uniform(ko, (out_dim, out_dim), jnp.float32, -bound_out, bound_out)
    bo = jax.random.uniform(kb, (1, out_dim), jnp.float32, -bound_out, bound_out)

    # Fuse the QKV weight ONCE, outside the jitted forward (no per-call concat).
    w_qkv = jnp.concatenate([wq_t, wk_t, wv_t], axis=1)  # (D_in, 3*D_out)

    mha = jax.jit(functools.partial(efficient_mha, num_heads=num_heads))

    # --- case 1: tile-aligned sequence, full-precision MXU path -------------
    B, T = 2, 8
    x = jax.random.normal(kx, (B, T, in_dim), dtype=jnp.float32)
    out = jax.block_until_ready(mha(x, w_qkv, wo_t, bo))
    ref = _reference(x, wq_t, wk_t, wv_t, wo_t, bo, num_heads)
    assert out.shape == (B, T, out_dim)
    # Tolerance relaxed vs 1e-5 because the softmax denominator uses the EUP
    # approximate reciprocal (pl.reciprocal(..., approx=True)).
    assert jnp.allclose(out, ref, atol=2e-3, rtol=2e-3), float(jnp.max(jnp.abs(out - ref)))

    # --- case 2: non-divisible sequence (exercises padding + key masking) ---
    T2 = 12
    x2 = jax.random.normal(kx2, (B, T2, in_dim), dtype=jnp.float32)
    out2 = jax.block_until_ready(mha(x2, w_qkv, wo_t, bo))
    ref2 = _reference(x2, wq_t, wk_t, wv_t, wo_t, bo, num_heads)
    assert out2.shape == (B, T2, out_dim)
    assert jnp.allclose(out2, ref2, atol=2e-3, rtol=2e-3), float(jnp.max(jnp.abs(out2 - ref2)))

    # --- case 3: bf16 MXU-operand fast path (v6e/v7x), looser tolerance -----
    mha_bf16 = jax.jit(
        functools.partial(efficient_mha, num_heads=num_heads, mxu_dtype=jnp.bfloat16)
    )
    out3 = jax.block_until_ready(mha_bf16(x, w_qkv, wo_t, bo))
    assert jnp.allclose(out3, ref, atol=5e-2, rtol=5e-2), float(jnp.max(jnp.abs(out3 - ref)))

    print("KERNEL_OK")
</pallas_src>

<mosaic_0001>
module attributes {stable_mosaic.version = 11 : i64} {
  func.func @_matmul_kernel(%arg0: i32, %arg1: i32, %arg2: i32, %arg3: memref<16x32xf32, #tpu.memory_space<vmem>>, %arg4: memref<32x96xf32, #tpu.memory_space<vmem>>, %arg5: memref<16x96xf32, #tpu.memory_space<vmem>>, %arg6: memref<16x96xf32, #tpu.memory_space<vmem>>) attributes {dimension_semantics = [#tpu.dimension_semantics<parallel>, #tpu.dimension_semantics<parallel>, #tpu.dimension_semantics<arbitrary>], iteration_bounds = array<i64: 1, 1, 1>, scalar_prefetch = 0 : i64, scratch_operands = 1 : i64, tpu.core_type = #tpu.core_type<tc>, window_params = [{transform_indices = @transform_0, window_bounds = array<i64: 16, 32>}, {transform_indices = @transform_1, window_bounds = array<i64: 32, 96>}, {transform_indices = @transform_2, window_bounds = array<i64: 16, 96>}]} {
    %c0_i32 = arith.constant 0 : i32
    %0 = arith.cmpi eq, %arg2, %c0_i32 : i32
    %1 = arith.extui %0 : i1 to i32
    %c0_i32_0 = arith.constant 0 : i32
    %2 = arith.cmpi ne, %1, %c0_i32_0 : i32
    scf.if %2 {
      %cst_10 = arith.constant 0.000000e+00 : f32
      %12 = vector.broadcast %cst_10 : f32 to vector<16x96xf32>
      %c0_11 = arith.constant 0 : index
      %c0_12 = arith.constant 0 : index
      %13 = vector.load %arg6[%c0_11, %c0_12] : memref<16x96xf32, #tpu.memory_space<vmem>>, vector<16x96xf32>
      tpu.vector_store %arg6[%c0_11, %c0_12], %12 {strides = array<i32>} : memref<16x96xf32, #tpu.memory_space<vmem>>, vector<16x96xf32>,
    } else {
    }
    %c0 = arith.constant 0 : index
    %c0_1 = arith.constant 0 : index
    %3 = vector.load %arg6[%c0, %c0_1] : memref<16x96xf32, #tpu.memory_space<vmem>>, vector<16x96xf32>
    %c0_2 = arith.constant 0 : index
    %c0_3 = arith.constant 0 : index
    %4 = vector.load %arg3[%c0_2, %c0_3] : memref<16x32xf32, #tpu.memory_space<vmem>>, vector<16x32xf32>
    %c0_4 = arith.constant 0 : index
    %c0_5 = arith.constant 0 : index
    %5 = vector.load %arg4[%c0_4, %c0_5] : memref<32x96xf32, #tpu.memory_space<vmem>>, vector<32x96xf32>
    %cst = arith.constant dense<0.000000e+00> : vector<16x96xf32>
    %6 = tpu.matmul %4, %5, %cst {dimension_numbers = #tpu.dot_dimension_numbers<[1], [0], [0], [1], [0, 0, 1, 1], [], []>} : vector<16x32xf32>, vector<32x96xf32>, vector<16x96xf32> -> vector<16x96xf32>
    %7 = arith.addf %3, %6 : vector<16x96xf32>
    %c0_6 = arith.constant 0 : index
    %c0_7 = arith.constant 0 : index
    %8 = vector.load %arg6[%c0_6, %c0_7] : memref<16x96xf32, #tpu.memory_space<vmem>>, vector<16x96xf32>
    tpu.vector_store %arg6[%c0_6, %c0_7], %7 {strides = array<i32>} : memref<16x96xf32, #tpu.memory_space<vmem>>, vector<16x96xf32>,
    %c0_i32_8 = arith.constant 0 : i32
    %9 = arith.cmpi eq, %arg2, %c0_i32_8 : i32
    %10 = arith.extui %9 : i1 to i32
    %c0_i32_9 = arith.constant 0 : i32
    %11 = arith.cmpi ne, %10, %c0_i32_9 : i32
    scf.if %11 {
      %c0_10 = arith.constant 0 : index
      %c0_11 = arith.constant 0 : index
      %12 = vector.load %arg6[%c0_10, %c0_11] : memref<16x96xf32, #tpu.memory_space<vmem>>, vector<16x96xf32>
      %c0_12 = arith.constant 0 : index
      %c0_13 = arith.constant 0 : index
      %13 = vector.load %arg5[%c0_12, %c0_13] : memref<16x96xf32, #tpu.memory_space<vmem>>, vector<16x96xf32>
      tpu.vector_store %arg5[%c0_12, %c0_13], %12 {strides = array<i32>} : memref<16x96xf32, #tpu.memory_space<vmem>>, vector<16x96xf32>,
    } else {
    }
    return
  }
  func.func @transform_0(%arg0: i32, %arg1: i32, %arg2: i32) -> (i32, i32) {
    %c0_i32 = arith.constant 0 : i32
    return %arg0, %arg2 : i32, i32
  }
  func.func @transform_1(%arg0: i32, %arg1: i32, %arg2: i32) -> (i32, i32) {
    %c0_i32 = arith.constant 0 : i32
    return %arg2, %arg1 : i32, i32
  }
  func.func @transform_2(%arg0: i32, %arg1: i32, %arg2: i32) -> (i32, i32) {
    %c0_i32 = arith.constant 0 : i32
    return %arg0, %arg1 : i32, i32
  }
}

module attributes {stable_mosaic.version = 11 : i64} {
  func.func @_flash_kernel(%arg0: i32, %arg1: i32, %arg2: i32, %arg3: memref<2x8x16xf32, #tpu.memory_space<vmem>>, %arg4: memref<2x8x16xf32, #tpu.memory_space<vmem>>, %arg5: memref<2x8x16xf32, #tpu.memory_space<vmem>>, %arg6: memref<2x8x16xf32, #tpu.memory_space<vmem>>, %arg7: memref<2x8x1xf32, #tpu.memory_space<vmem>>, %arg8: memref<2x8x1xf32, #tpu.memory_space<vmem>>, %arg9: memref<2x8x16xf32, #tpu.memory_space<vmem>>) attributes {dimension_semantics = [#tpu.dimension_semantics<parallel>, #tpu.dimension_semantics<parallel>, #tpu.dimension_semantics<arbitrary>], iteration_bounds = array<i64: 2, 1, 1>, scalar_prefetch = 0 : i64, scratch_operands = 3 : i64, tpu.core_type = #tpu.core_type<tc>, window_params = [{transform_indices = @transform_0, window_bounds = array<i64: 2, 8, 16>}, {transform_indices = @transform_1, window_bounds = array<i64: 2, 8, 16>}, {transform_indices = @transform_2, window_bounds = array<i64: 2, 8, 16>}, {transform_indices = @transform_3, window_bounds = array<i64: 2, 8, 16>}]} {
    %c0_i32 = arith.constant 0 : i32
    %0 = arith.cmpi eq, %arg2, %c0_i32 : i32
    %1 = arith.extui %0 : i1 to i32
    %c0_i32_0 = arith.constant 0 : i32
    %2 = arith.cmpi ne, %1, %c0_i32_0 : i32
    scf.if %2 {
      %cst_33 = arith.constant 0xFF800000 : f32
      %34 = vector.broadcast %cst_33 : f32 to vector<2x8x1xf32>
      %c0_34 = arith.constant 0 : index
      %c0_35 = arith.constant 0 : index
      %c0_36 = arith.constant 0 : index
      %35 = vector.load %arg7[%c0_34, %c0_35, %c0_36] : memref<2x8x1xf32, #tpu.memory_space<vmem>>, vector<2x8x1xf32>
      tpu.vector_store %arg7[%c0_34, %c0_35, %c0_36], %34 {strides = array<i32>} : memref<2x8x1xf32, #tpu.memory_space<vmem>>, vector<2x8x1xf32>,
      %cst_37 = arith.constant 0.000000e+00 : f32
      %36 = vector.broadcast %cst_37 : f32 to vector<2x8x1xf32>
      %c0_38 = arith.constant 0 : index
      %c0_39 = arith.constant 0 : index
      %c0_40 = arith.constant 0 : index
      %37 = vector.load %arg8[%c0_38, %c0_39, %c0_40] : memref<2x8x1xf32, #tpu.memory_space<vmem>>, vector<2x8x1xf32>
      tpu.vector_store %arg8[%c0_38, %c0_39, %c0_40], %36 {strides = array<i32>} : memref<2x8x1xf32, #tpu.memory_space<vmem>>, vector<2x8x1xf32>,
      %cst_41 = arith.constant 0.000000e+00 : f32
      %38 = vector.broadcast %cst_41 : f32 to vector<2x8x16xf32>
      %c0_42 = arith.constant 0 : index
      %c0_43 = arith.constant 0 : index
      %c0_44 = arith.constant 0 : index
      %39 = vector.load %arg9[%c0_42, %c0_43, %c0_44] : memref<2x8x16xf32, #tpu.memory_space<vmem>>, vector<2x8x16xf32>
      tpu.vector_store %arg9[%c0_42, %c0_43, %c0_44], %38 {strides = array<i32>} : memref<2x8x16xf32, #tpu.memory_space<vmem>>, vector<2x8x16xf32>,
    } else {
    }
    %c0 = arith.constant 0 : index
    %c0_1 = arith.constant 0 : index
    %c0_2 = arith.constant 0 : index
    %3 = vector.load %arg3[%c0, %c0_1, %c0_2] : memref<2x8x16xf32, #tpu.memory_space<vmem>>, vector<2x8x16xf32>
    %cst = arith.constant 2.500000e-01 : f32
    %4 = vector.broadcast %cst : f32 to vector<2x8x16xf32>
    %5 = arith.mulf %3, %4 : vector<2x8x16xf32>
    %c0_3 = arith.constant 0 : index
    %c0_4 = arith.constant 0 : index
    %c0_5 = arith.constant 0 : index
    %6 = vector.load %arg4[%c0_3, %c0_4, %c0_5] : memref<2x8x16xf32, #tpu.memory_space<vmem>>, vector<2x8x16xf32>
    "tpu.trace_start"() <{level = 10 : i32, message = "hqd,hkd->hqk"}> : () -> ()
    %cst_6 = arith.constant dense<0.000000e+00> : vector<2x8x8xf32>
    %7 = tpu.matmul %5, %6, %cst_6 {dimension_numbers = #tpu.dot_dimension_numbers<[2], [2], [1], [1], [0, 0, 0, 1, 1, 1], [0], [0]>} : vector<2x8x16xf32>, vector<2x8x16xf32>, vector<2x8x8xf32> -> vector<2x8x8xf32>
    "tpu.trace_stop"() : () -> ()
    %c0_7 = arith.constant 0 : index
    %c0_8 = arith.constant 0 : index
    %c0_9 = arith.constant 0 : index
    %8 = vector.load %arg7[%c0_7, %c0_8, %c0_9] : memref<2x8x1xf32, #tpu.memory_space<vmem>>, vector<2x8x1xf32>
    %cst_10 = arith.constant dense<0xFF800000> : vector<2x8xf32>
    %9 = vector.multi_reduction <maximumf>, %7, %cst_10 [2] : vector<2x8x8xf32> to vector<2x8xf32>
    %10 = vector.shape_cast %9 : vector<2x8xf32> to vector<2x8x1xf32>
    %11 = arith.maximumf %8, %10 : vector<2x8x1xf32>
    %12 = arith.subf %8, %11 : vector<2x8x1xf32>
    %13 = math.exp %12 : vector<2x8x1xf32>
    %14 = vector.broadcast %11 : vector<2x8x1xf32> to vector<2x8x8xf32>
    %15 = arith.subf %7, %14 : vector<2x8x8xf32>
    %16 = math.exp %15 : vector<2x8x8xf32>
    %c0_11 = arith.constant 0 : index
    %c0_12 = arith.constant 0 : index
    %c0_13 = arith.constant 0 : index
    %17 = vector.load %arg8[%c0_11, %c0_12, %c0_13] : memref<2x8x1xf32, #tpu.memory_space<vmem>>, vector<2x8x1xf32>
    %18 = arith.mulf %13, %17 : vector<2x8x1xf32>
    %cst_14 = arith.constant dense<0.000000e+00> : vector<2x8xf32>
    %19 = vector.multi_reduction <add>, %16, %cst_14 [2] : vector<2x8x8xf32> to vector<2x8xf32>
    %20 = vector.shape_cast %19 : vector<2x8xf32> to vector<2x8x1xf32>
    %21 = arith.addf %18, %20 : vector<2x8x1xf32>
    %c0_15 = arith.constant 0 : index
    %c0_16 = arith.constant 0 : index
    %c0_17 = arith.constant 0 : index
    %22 = vector.load %arg8[%c0_15, %c0_16, %c0_17] : memref<2x8x1xf32, #tpu.memory_space<vmem>>, vector<2x8x1xf32>
    tpu.vector_store %arg8[%c0_15, %c0_16, %c0_17], %21 {strides = array<i32>} : memref<2x8x1xf32, #tpu.memory_space<vmem>>, vector<2x8x1xf32>,
    %c0_18 = arith.constant 0 : index
    %c0_19 = arith.constant 0 : index
    %c0_20 = arith.constant 0 : index
    %23 = vector.load %arg9[%c0_18, %c0_19, %c0_20] : memref<2x8x16xf32, #tpu.memory_space<vmem>>, vector<2x8x16xf32>
    %24 = vector.broadcast %13 : vector<2x8x1xf32> to vector<2x8x16xf32>
    %25 = arith.mulf %24, %23 : vector<2x8x16xf32>
    %c0_21 = arith.constant 0 : index
    %c0_22 = arith.constant 0 : index
    %c0_23 = arith.constant 0 : index
    %26 = vector.load %arg5[%c0_21, %c0_22, %c0_23] : memref<2x8x16xf32, #tpu.memory_space<vmem>>, vector<2x8x16xf32>
    "tpu.trace_start"() <{level = 10 : i32, message = "hqk,hkd->hqd"}> : () -> ()
    %cst_24 = arith.constant dense<0.000000e+00> : vector<2x8x16xf32>
    %27 = tpu.matmul %16, %26, %cst_24 {dimension_numbers = #tpu.dot_dimension_numbers<[2], [1], [1], [2], [0, 0, 0, 1, 1, 2], [0], [0]>} : vector<2x8x8xf32>, vector<2x8x16xf32>, vector<2x8x16xf32> -> vector<2x8x16xf32>
    "tpu.trace_stop"() : () -> ()
    %28 = arith.addf %25, %27 : vector<2x8x16xf32>
    %c0_25 = arith.constant 0 : index
    %c0_26 = arith.constant 0 : index
    %c0_27 = arith.constant 0 : index
    %29 = vector.load %arg9[%c0_25, %c0_26, %c0_27] : memref<2x8x16xf32, #tpu.memory_space<vmem>>, vector<2x8x16xf32>
    tpu.vector_store %arg9[%c0_25, %c0_26, %c0_27], %28 {strides = array<i32>} : memref<2x8x16xf32, #tpu.memory_space<vmem>>, vector<2x8x16xf32>,
    %c0_28 = arith.constant 0 : index
    %c0_29 = arith.constant 0 : index
    %c0_30 = arith.constant 0 : index
    %30 = vector.load %arg7[%c0_28, %c0_29, %c0_30] : memref<2x8x1xf32, #tpu.memory_space<vmem>>, vector<2x8x1xf32>
    tpu.vector_store %arg7[%c0_28, %c0_29, %c0_30], %11 {strides = array<i32>} : memref<2x8x1xf32, #tpu.memory_space<vmem>>, vector<2x8x1xf32>,
    %c0_i32_31 = arith.constant 0 : i32
    %31 = arith.cmpi eq, %arg2, %c0_i32_31 : i32
    %32 = arith.extui %31 : i1 to i32
    %c0_i32_32 = arith.constant 0 : i32
    %33 = arith.cmpi ne, %32, %c0_i32_32 : i32
    scf.if %33 {
      %c0_33 = arith.constant 0 : index
      %c0_34 = arith.constant 0 : index
      %c0_35 = arith.constant 0 : index
      %34 = vector.load %arg8[%c0_33, %c0_34, %c0_35] : memref<2x8x1xf32, #tpu.memory_space<vmem>>, vector<2x8x1xf32>
      %35 = tpu.reciprocal %34 {approx = true} : vector<2x8x1xf32> -> vector<2x8x1xf32>
      %c0_36 = arith.constant 0 : index
      %c0_37 = arith.constant 0 : index
      %c0_38 = arith.constant 0 : index
      %36 = vector.load %arg9[%c0_36, %c0_37, %c0_38] : memref<2x8x16xf32, #tpu.memory_space<vmem>>, vector<2x8x16xf32>
      %37 = vector.broadcast %35 : vector<2x8x1xf32> to vector<2x8x16xf32>
      %38 = arith.mulf %36, %37 : vector<2x8x16xf32>
      %c0_39 = arith.constant 0 : index
      %c0_40 = arith.constant 0 : index
      %c0_41 = arith.constant 0 : index
      %39 = vector.load %arg6[%c0_39, %c0_40, %c0_41] : memref<2x8x16xf32, #tpu.memory_space<vmem>>, vector<2x8x16xf32>
      tpu.vector_store %arg6[%c0_39, %c0_40, %c0_41], %38 {strides = array<i32>} : memref<2x8x16xf32, #tpu.memory_space<vmem>>, vector<2x8x16xf32>,
    } else {
    }
    return
  }
  func.func @transform_0(%arg0: i32, %arg1: i32, %arg2: i32) -> (i32, i32, i32) {
    %c0_i32 = arith.constant 0 : i32
    %c0_i32_0 = arith.constant 0 : i32
    return %arg0, %arg1, %c0_i32 : i32, i32, i32
  }
  func.func @transform_1(%arg0: i32, %arg1: i32, %arg2: i32) -> (i32, i32, i32) {
    %c0_i32 = arith.constant 0 : i32
    %c0_i32_0 = arith.constant 0 : i32
    return %arg0, %arg2, %c0_i32 : i32, i32, i32
  }
  func.func @transform_2(%arg0: i32, %arg1: i32, %arg2: i32) -> (i32, i32, i32) {
    %c0_i32 = arith.constant 0 : i32
    %c0_i32_0 = arith.constant 0 : i32
    return %arg0, %arg2, %c0_i32 : i32, i32, i32
  }
  func.func @transform_3(%arg0: i32, %arg1: i32, %arg2: i32) -> (i32, i32, i32) {
    %c0_i32 = arith.constant 0 : i32
    %c0_i32_0 = arith.constant 0 : i32
    return %arg0, %arg1, %c0_i32 : i32, i32, i32
  }
}

module attributes {stable_mosaic.version = 11 : i64} {
  func.func @_matmul_bias_kernel(%arg0: i32, %arg1: i32, %arg2: i32, %arg3: memref<16x32xf32, #tpu.memory_space<vmem>>, %arg4: memref<32x32xf32, #tpu.memory_space<vmem>>, %arg5: memref<1x32xf32, #tpu.memory_space<vmem>>, %arg6: memref<16x32xf32, #tpu.memory_space<vmem>>, %arg7: memref<16x32xf32, #tpu.memory_space<vmem>>) attributes {dimension_semantics = [#tpu.dimension_semantics<parallel>, #tpu.dimension_semantics<parallel>, #tpu.dimension_semantics<arbitrary>], iteration_bounds = array<i64: 1, 1, 1>, scalar_prefetch = 0 : i64, scratch_operands = 1 : i64, tpu.core_type = #tpu.core_type<tc>, window_params = [{transform_indices = @transform_0, window_bounds = array<i64: 16, 32>}, {transform_indices = @transform_1, window_bounds = array<i64: 32, 32>}, {transform_indices = @transform_2, window_bounds = array<i64: 1, 32>}, {transform_indices = @transform_3, window_bounds = array<i64: 16, 32>}]} {
    %c0_i32 = arith.constant 0 : i32
    %0 = arith.cmpi eq, %arg2, %c0_i32 : i32
    %1 = arith.extui %0 : i1 to i32
    %c0_i32_0 = arith.constant 0 : i32
    %2 = arith.cmpi ne, %1, %c0_i32_0 : i32
    scf.if %2 {
      %cst_10 = arith.constant 0.000000e+00 : f32
      %12 = vector.broadcast %cst_10 : f32 to vector<16x32xf32>
      %c0_11 = arith.constant 0 : index
      %c0_12 = arith.constant 0 : index
      %13 = vector.load %arg7[%c0_11, %c0_12] : memref<16x32xf32, #tpu.memory_space<vmem>>, vector<16x32xf32>
      tpu.vector_store %arg7[%c0_11, %c0_12], %12 {strides = array<i32>} : memref<16x32xf32, #tpu.memory_space<vmem>>, vector<16x32xf32>,
    } else {
    }
    %c0 = arith.constant 0 : index
    %c0_1 = arith.constant 0 : index
    %3 = vector.load %arg7[%c0, %c0_1] : memref<16x32xf32, #tpu.memory_space<vmem>>, vector<16x32xf32>
    %c0_2 = arith.constant 0 : index
    %c0_3 = arith.constant 0 : index
    %4 = vector.load %arg3[%c0_2, %c0_3] : memref<16x32xf32, #tpu.memory_space<vmem>>, vector<16x32xf32>
    %c0_4 = arith.constant 0 : index
    %c0_5 = arith.constant 0 : index
    %5 = vector.load %arg4[%c0_4, %c0_5] : memref<32x32xf32, #tpu.memory_space<vmem>>, vector<32x32xf32>
    %cst = arith.constant dense<0.000000e+00> : vector<16x32xf32>
    %6 = tpu.matmul %4, %5, %cst {dimension_numbers = #tpu.dot_dimension_numbers<[1], [0], [0], [1], [0, 0, 1, 1], [], []>} : vector<16x32xf32>, vector<32x32xf32>, vector<16x32xf32> -> vector<16x32xf32>
    %7 = arith.addf %3, %6 : vector<16x32xf32>
    %c0_6 = arith.constant 0 : index
    %c0_7 = arith.constant 0 : index
    %8 = vector.load %arg7[%c0_6, %c0_7] : memref<16x32xf32, #tpu.memory_space<vmem>>, vector<16x32xf32>
    tpu.vector_store %arg7[%c0_6, %c0_7], %7 {strides = array<i32>} : memref<16x32xf32, #tpu.memory_space<vmem>>, vector<16x32xf32>,
    %c0_i32_8 = arith.constant 0 : i32
    %9 = arith.cmpi eq, %arg2, %c0_i32_8 : i32
    %10 = arith.extui %9 : i1 to i32
    %c0_i32_9 = arith.constant 0 : i32
    %11 = arith.cmpi ne, %10, %c0_i32_9 : i32
    scf.if %11 {
      %c0_10 = arith.constant 0 : index
      %c0_11 = arith.constant 0 : index
      %12 = vector.load %arg7[%c0_10, %c0_11] : memref<16x32xf32, #tpu.memory_space<vmem>>, vector<16x32xf32>
      %c0_12 = arith.constant 0 : index
      %c0_13 = arith.constant 0 : index
      %13 = vector.load %arg5[%c0_12, %c0_13] : memref<1x32xf32, #tpu.memory_space<vmem>>, vector<1x32xf32>
      %14 = vector.broadcast %13 : vector<1x32xf32> to vector<16x32xf32>
      %15 = arith.addf %12, %14 : vector<16x32xf32>
      %c0_14 = arith.constant 0 : index
      %c0_15 = arith.constant 0 : index
      %16 = vector.load %arg6[%c0_14, %c0_15] : memref<16x32xf32, #tpu.memory_space<vmem>>, vector<16x32xf32>
      tpu.vector_store %arg6[%c0_14, %c0_15], %15 {strides = array<i32>} : memref<16x32xf32, #tpu.memory_space<vmem>>, vector<16x32xf32>,
    } else {
    }
    return
  }
  func.func @transform_0(%arg0: i32, %arg1: i32, %arg2: i32) -> (i32, i32) {
    %c0_i32 = arith.constant 0 : i32
    return %arg0, %arg2 : i32, i32
  }
  func.func @transform_1(%arg0: i32, %arg1: i32, %arg2: i32) -> (i32, i32) {
    %c0_i32 = arith.constant 0 : i32
    return %arg2, %arg1 : i32, i32
  }
  func.func @transform_2(%arg0: i32, %arg1: i32, %arg2: i32) -> (i32, i32) {
    %c0_i32 = arith.constant 0 : i32
    %c0_i32_0 = arith.constant 0 : i32
    return %c0_i32, %arg1 : i32, i32
  }
  func.func @transform_3(%arg0: i32, %arg1: i32, %arg2: i32) -> (i32, i32) {
    %c0_i32 = arith.constant 0 : i32
    return %arg0, %arg1 : i32, i32
  }
}

</mosaic_0001>

<llo_original>
// kernel: efficient_mha.3
$region0: #{efficient_mha.3}
  #allocation0 [shape = 'u32[]', space=smem, size = 0x4, offset = 0x4, fixed_abs, tag = 'smem constant byte address 0x4 - core index']
  #allocation1 [shape = 'u32[144,128]{1,0:T(1,128)}', space=vmem, size = 0x12000, scoped, tag = 'internal scratch']
  #allocation2 [shape = 'f32[16,96]{1,0:T(8,128)}', space=vmem, size = 0x2000, scoped, tag = 'scratch operand']
  %s0 = inlined_call_operand.hbm [shape: f32[16,32], index: 0, kind: input, shape index: {}]
  %s1 = inlined_call_operand.hbm [shape: f32[32,96], index: 1, kind: input, shape index: {}]
  %s2 = inlined_call_operand.vmem [shape: f32[16,96], index: 2, kind: output, shape index: {}]
  %s3 = sld [smem:[#allocation0]]
  $region34: #{efficient_mha.3} parent=0
    _
  %s5 = ssub.s32 1, %s3
  %s6 = scalar_select 0, %s5, %s3
  $region1: #{efficient_mha.3} parent=0
    #allocation3 [shape = 'u8[8192]{0}', space=vmem, size = 0x2000, scoped, tag = 'input window, operand 0, single buffered']
    #allocation4 [shape = 's32[1]{0}', space=sflag, size = 0x4, scoped, tag = 'scoped memory for efficient_mha.3']
    #allocation5 [shape = 'u8[16384]{0}', space=vmem, size = 0x4000, scoped, tag = 'input window, operand 1, single buffered']
    #allocation6 [shape = 's32[1]{0}', space=sflag, size = 0x4, scoped, tag = 'scoped memory for efficient_mha.3']
    %7 = vsyncpa [#allocation4], 0
    %8 = vsyncpa [#allocation6], 0
    // Predicated region
    $region2: #{efficient_mha.3} parent=1 // pred_check
      _
    $region3: #{efficient_mha.3} parent=1 // pred_check_branch
      %10 = sbr.rel (0) target = $region5
    $region4: #{efficient_mha.3} parent=1 // pred_region
      %s12 = ssub.s32 256, 256
      %13 = vsyncadd [#allocation4], %s12
      %s14 = sshll.u32 [#allocation3], 4
      %s15 = int_to_ptr.vmem [resolvable:$true] %s14
      %20 = dma.hbm_to_vmem [thread:$0]  %s0, 256, %s15, [#allocation4], 128, 128, 8
    $region5: #{efficient_mha.3} parent=1 // pred_fallthru
      _
    // Predicated region
    $region6: #{efficient_mha.3} parent=1 // pred_check
      _
    $region7: #{efficient_mha.3} parent=1 // pred_check_branch
      %22 = sbr.rel (0) target = $region9
    $region8: #{efficient_mha.3} parent=1 // pred_region
      %s24 = ssub.s32 512, 512
      %25 = vsyncadd [#allocation6], %s24
      %s26 = sshll.u32 [#allocation5], 4
      %s27 = int_to_ptr.vmem [resolvable:$true] %s26
      %32 = dma.hbm_to_vmem [thread:$0]  %s1, 512, %s27, [#allocation6], 128, 128, 8
    $region9: #{efficient_mha.3} parent=1 // pred_fallthru
      _
    // Predicated region
    $region10: #{efficient_mha.3} parent=1 // pred_check
      _
    $region11: #{efficient_mha.3} parent=1 // pred_check_branch
      %34 = sbr.rel (0) target = $region13
    $region12: #{efficient_mha.3} parent=1 // pred_region
      %35 = dma.done [#allocation4], 256
    $region13: #{efficient_mha.3} parent=1 // pred_fallthru
      _
    // Predicated region
    $region14: #{efficient_mha.3} parent=1 // pred_check
      _
    $region15: #{efficient_mha.3} parent=1 // pred_check_branch
      %37 = sbr.rel (0) target = $region17
    $region16: #{efficient_mha.3} parent=1 // pred_region
      %38 = dma.done [#allocation6], 512
    $region17: #{efficient_mha.3} parent=1 // pred_fallthru
      _
    %p39 = scmp.eq.s32.totalorder 0, 0
    // Predicated region
    $region18: #{efficient_mha.3} parent=1 // pred_check
      %p40 = pneg %p39
    $region19: #{efficient_mha.3} parent=1 // pred_check_branch
      %42 = sbr.rel (%p40) target = $region21
    $region20: #{efficient_mha.3} parent=1 // pred_region
      %vm43 = vcmask 785408
      %44 = vst.msk [vmem:[#allocation2] sm:$0xff] %vm43, 0.0
      %45 = vst.msk [vmem:[#allocation2 + $0x8] sm:$0xff] %vm43, 0.0
    $region21: #{efficient_mha.3} parent=1 // pred_fallthru
      _
    %v46 = vld [vmem:[#allocation2] sm:$0xff]
    %v47 = vld [vmem:[#allocation2 + $0x8] sm:$0xff]
    %v48 = vld [vmem:[#allocation3] sm:$0xff]
    %v49 = vld [vmem:[#allocation3 + $0x8] sm:$0xff]
    %v50 = vld [vmem:[#allocation5] sm:$0xff]
    %v51 = vld [vmem:[#allocation5 + $0x8] sm:$0xff]
    %v52 = vld [vmem:[#allocation5 + $0x10] sm:$0xff]
    %v53 = vld [vmem:[#allocation5 + $0x18] sm:$0xff]
    %vm54 = vcmask 261120
    %v56 = vsel %vm54, %v48, 0
    %v59 = vsel %vm54, %v49, 0
    %61 = vmatprep.subr.mxu0 0.0
    %62 = vmatpush1.msra.mxu0 %v50
    %63 = vmatprep.subr.mxu0 0.0
    %64 = vmatpush1.msra.mxu0 %v51
    %65 = vmatprep.subr.mxu0 0.0
    %66 = vmatpush1.msra.mxu0 %v52
    %67 = vmatprep.subr.mxu0 0.0
    %68 = vmatpush1.msra.mxu0 %v53
    %69 = vmatprep.subr.mxu0 0.0
    %70 = vmatpush1.msra.mxu0 0.0
    %71 = vmatprep.subr.mxu0 0.0
    %72 = vmatpush1.msra.mxu0 0.0
    %73 = vmatprep.subr.mxu0 0.0
    %74 = vmatpush1.msra.mxu0 0.0
    %75 = vmatprep.subr.mxu0 0.0
    %76 = vmatpush1.msra.mxu0 0.0
    %77 = vmatprep.subr.mxu0 0.0
    %78 = vmatpush1.msra.mxu0 0.0
    %79 = vmatprep.subr.mxu0 0.0
    %80 = vmatpush1.msra.mxu0 0.0
    %81 = vmatprep.subr.mxu0 0.0
    %82 = vmatpush1.msra.mxu0 0.0
    %83 = vmatprep.subr.mxu0 0.0
    %84 = vmatpush1.msra.mxu0 0.0
    %85 = vmatprep.subr.mxu0 0.0
    %86 = vmatpush1.msra.mxu0 0.0
    %87 = vmatprep.subr.mxu0 0.0
    %88 = vmatpush1.msra.mxu0 0.0
    %89 = vmatprep.subr.mxu0 0.0
    %90 = vmatpush1.msra.mxu0 0.0
    %91 = vmatprep.subr.mxu0 0.0
    %92 = vmatpush1.msra.mxu0 0.0
    %93 = vmatprep.subr.mxu0 0.0
    %94 = vmatpush1.msra.mxu0 0.0
    %95 = vmatprep.subr.mxu0 0.0
    %96 = vmatpush1.msra.mxu0 0.0
    %97 = vmatprep.subr.mxu0 0.0
    %98 = vmatpush1.msra.mxu0 0.0
    %99 = vmatprep.subr.mxu0 0.0
    %100 = vmatpush1.msra.mxu0 0.0
    %101 = vmatprep.subr.mxu0 0.0
    %102 = vmatpush1.msra.mxu0 0.0
    %103 = vmatprep.subr.mxu0 0.0
    %104 = vmatpush1.msra.mxu0 0.0
    %105 = vmatprep.subr.mxu0 0.0
    %106 = vmatpush1.msra.mxu0 0.0
    %107 = vmatprep.subr.mxu0 0.0
    %108 = vmatpush1.msra.mxu0 0.0
    %109 = vmatprep.subr.mxu0 0.0
    %110 = vmatpush1.msra.mxu0 0.0
    %111 = vmatprep.subr.mxu0 0.0
    %112 = vmatpush1.msra.mxu0 0.0
    %113 = vmatprep.subr.mxu0 0.0
    %114 = vmatpush1.msra.mxu0 0.0
    %115 = vmatprep.subr.mxu0 0.0
    %116 = vmatpush1.msra.mxu0 0.0
    %117 = vmatprep.subr.mxu0 0.0
    %118 = vmatpush1.msra.mxu0 0.0
    %119 = vmatprep.subr.mxu0 0.0
    %120 = vmatpush1.msra.mxu0 0.0
    %121 = vmatprep.subr.mxu0 0.0
    %122 = vmatpush1.msra.mxu0 0.0
    %123 = vmatprep.subr.mxu0 0.0
    %124 = vmatpush1.msra.mxu0 0.0
    %125 = vmatprep.mubr.f32.mxu0 0.0
    %126 = vmatmul.mubr.f32.gmra.mrb[0].mxu0 %v56
    %v127 = vpop.f32.mrb[0].mxu0
    %v128 = vadd.f32 0.0, %v127
    %v129 = vpop.f32.mrb[0].mxu0
    %130 = vmatprep.mubr.f32.mxu0 0.0
    %131 = vmatmul.mubr.f32.gmra.mrb[0].mxu0 %v59
    %v132 = vpop.f32.mrb[0].mxu0
    %v133 = vadd.f32 0.0, %v132
    %v134 = vpop.f32.mrb[0].mxu0
    %135 = vdwg.mxu0
    %v136 = vadd.f32 %v46, %v128
    %v137 = vadd.f32 %v47, %v133
    %vm138 = vcmask 785408
    %139 = vst.msk [vmem:[#allocation2] sm:$0xff] %vm138, %v136
    %140 = vst.msk [vmem:[#allocation2 + $0x8] sm:$0xff] %vm138, %v137
    // Predicated region
    $region22: #{efficient_mha.3} parent=1 // pred_check
      %p141 = pneg %p39
    $region23: #{efficient_mha.3} parent=1 // pred_check_branch
      %143 = sbr.rel (%p141) target = $region25
    $region24: #{efficient_mha.3} parent=1 // pred_region
      %v144 = vld [vmem:[#allocation2] sm:$0xff]
      %v145 = vld [vmem:[#allocation2 + $0x8] sm:$0xff]
      %146 = vst.msk [vmem:[%s2] sm:$0xff] %vm138, %v144
      %147 = vst.msk [vmem:[%s2 + $0x8] sm:$0xff] %vm138, %v145
    $region25: #{efficient_mha.3} parent=1 // pred_fallthru
      _
    // Predicated region
    $region26: #{efficient_mha.3} parent=1 // pred_check
      _
    $region27: #{efficient_mha.3} parent=1 // pred_check_branch
      %149 = sbr.rel (0) target = $region29
    $region28: #{efficient_mha.3} parent=1 // pred_region
      _
    $region29: #{efficient_mha.3} parent=1 // pred_fallthru
      _
    // Predicated region
    $region30: #{efficient_mha.3} parent=1 // pred_check
      _
    $region31: #{efficient_mha.3} parent=1 // pred_check_branch
      %151 = sbr.rel (0) target = $region33
    $region32: #{efficient_mha.3} parent=1 // pred_region
      _
    $region33: #{efficient_mha.3} parent=1 // pred_fallthru
      _
    %152 = vsyncpa [#allocation4], 1
    %153 = vsyncpa [#allocation6], 1

// kernel: efficient_mha.5
$region0: #{efficient_mha.5}
  #allocation0 [shape = 'u32[]', space=smem, size = 0x4, offset = 0x4, fixed_abs, tag = 'smem constant byte address 0x4 - core index']
  #allocation1 [shape = 'u32[144,128]{1,0:T(1,128)}', space=vmem, size = 0x12000, scoped, tag = 'internal scratch']
  #allocation2 [shape = 'f32[16,32]{1,0:T(8,128)}', space=vmem, size = 0x2000, scoped, tag = 'scratch operand']
  %s0 = inlined_call_operand.vmem [shape: f32[16,32], index: 0, kind: input, shape index: {}]
  %s1 = inlined_call_operand.vmem [shape: f32[32,32], index: 1, kind: input, shape index: {}]
  %s2 = inlined_call_operand.vmem [shape: f32[1,32], index: 2, kind: input, shape index: {}]
  %s3 = inlined_call_operand.hbm [shape: f32[16,32], index: 3, kind: output, shape index: {}]
  %s4 = sld [smem:[#allocation0]]
  $region30: #{efficient_mha.5} parent=0
    _
  %s6 = ssub.s32 1, %s4
  %s7 = scalar_select 0, %s6, %s4
  $region1: #{efficient_mha.5} parent=0
    #allocation3 [shape = 'u8[8192]{0}', space=vmem, size = 0x2000, scoped, tag = 'output window, operand 0, single buffered']
    #allocation4 [shape = 's32[1]{0}', space=sflag, size = 0x4, scoped, tag = 'scoped memory for efficient_mha.5']
    %8 = vsyncpa [#allocation4], 0
    // Predicated region
    $region2: #{efficient_mha.5} parent=1 // pred_check
      _
    $region3: #{efficient_mha.5} parent=1 // pred_check_branch
      %10 = sbr.rel (0) target = $region5
    $region4: #{efficient_mha.5} parent=1 // pred_region
      _
    $region5: #{efficient_mha.5} parent=1 // pred_fallthru
      _
    // Predicated region
    $region6: #{efficient_mha.5} parent=1 // pred_check
      _
    $region7: #{efficient_mha.5} parent=1 // pred_check_branch
      %12 = sbr.rel (0) target = $region9
    $region8: #{efficient_mha.5} parent=1 // pred_region
      _
    $region9: #{efficient_mha.5} parent=1 // pred_fallthru
      _
    // Predicated region
    $region10: #{efficient_mha.5} parent=1 // pred_check
      _
    $region11: #{efficient_mha.5} parent=1 // pred_check_branch
      %14 = sbr.rel (0) target = $region13
    $region12: #{efficient_mha.5} parent=1 // pred_region
      _
    $region13: #{efficient_mha.5} parent=1 // pred_fallthru
      _
    %p15 = scmp.eq.s32.totalorder 0, 0
    // Predicated region
    $region14: #{efficient_mha.5} parent=1 // pred_check
      %p16 = pneg %p15
    $region15: #{efficient_mha.5} parent=1 // pred_check_branch
      %18 = sbr.rel (%p16) target = $region17
    $region16: #{efficient_mha.5} parent=1 // pred_region
      %vm19 = vcmask 261120
      %20 = vst.msk [vmem:[#allocation2] sm:$0xff] %vm19, 0.0
      %21 = vst.msk [vmem:[#allocation2 + $0x8] sm:$0xff] %vm19, 0.0
    $region17: #{efficient_mha.5} parent=1 // pred_fallthru
      _
    %v22 = vld [vmem:[#allocation2] sm:$0xff]
    %v23 = vld [vmem:[#allocation2 + $0x8] sm:$0xff]
    %v24 = vld [vmem:[%s0] sm:$0xff]
    %v25 = vld [vmem:[%s0 + $0x8] sm:$0xff]
    %v26 = vld [vmem:[%s1] sm:$0xff]
    %v27 = vld [vmem:[%s1 + $0x8] sm:$0xff]
    %v28 = vld [vmem:[%s1 + $0x10] sm:$0xff]
    %v29 = vld [vmem:[%s1 + $0x18] sm:$0xff]
    %vm30 = vcmask 261120
    %v32 = vsel %vm30, %v24, 0
    %v35 = vsel %vm30, %v25, 0
    %37 = vmatprep.subr.mxu0 0.0
    %38 = vmatpush1.msra.mxu0 %v26
    %39 = vmatprep.subr.mxu0 0.0
    %40 = vmatpush1.msra.mxu0 %v27
    %41 = vmatprep.subr.mxu0 0.0
    %42 = vmatpush1.msra.mxu0 %v28
    %43 = vmatprep.subr.mxu0 0.0
    %44 = vmatpush1.msra.mxu0 %v29
    %45 = vmatprep.subr.mxu0 0.0
    %46 = vmatpush1.msra.mxu0 0.0
    %47 = vmatprep.subr.mxu0 0.0
    %48 = vmatpush1.msra.mxu0 0.0
    %49 = vmatprep.subr.mxu0 0.0
    %50 = vmatpush1.msra.mxu0 0.0
    %51 = vmatprep.subr.mxu0 0.0
    %52 = vmatpush1.msra.mxu0 0.0
    %53 = vmatprep.subr.mxu0 0.0
    %54 = vmatpush1.msra.mxu0 0.0
    %55 = vmatprep.subr.mxu0 0.0
    %56 = vmatpush1.msra.mxu0 0.0
    %57 = vmatprep.subr.mxu0 0.0
    %58 = vmatpush1.msra.mxu0 0.0
    %59 = vmatprep.subr.mxu0 0.0
    %60 = vmatpush1.msra.mxu0 0.0
    %61 = vmatprep.subr.mxu0 0.0
    %62 = vmatpush1.msra.mxu0 0.0
    %63 = vmatprep.subr.mxu0 0.0
    %64 = vmatpush1.msra.mxu0 0.0
    %65 = vmatprep.subr.mxu0 0.0
    %66 = vmatpush1.msra.mxu0 0.0
    %67 = vmatprep.subr.mxu0 0.0
    %68 = vmatpush1.msra.mxu0 0.0
    %69 = vmatprep.subr.mxu0 0.0
    %70 = vmatpush1.msra.mxu0 0.0
    %71 = vmatprep.subr.mxu0 0.0
    %72 = vmatpush1.msra.mxu0 0.0
    %73 = vmatprep.subr.mxu0 0.0
    %74 = vmatpush1.msra.mxu0 0.0
    %75 = vmatprep.subr.mxu0 0.0
    %76 = vmatpush1.msra.mxu0 0.0
    %77 = vmatprep.subr.mxu0 0.0
    %78 = vmatpush1.msra.mxu0 0.0
    %79 = vmatprep.subr.mxu0 0.0
    %80 = vmatpush1.msra.mxu0 0.0
    %81 = vmatprep.subr.mxu0 0.0
    %82 = vmatpush1.msra.mxu0 0.0
    %83 = vmatprep.subr.mxu0 0.0
    %84 = vmatpush1.msra.mxu0 0.0
    %85 = vmatprep.subr.mxu0 0.0
    %86 = vmatpush1.msra.mxu0 0.0
    %87 = vmatprep.subr.mxu0 0.0
    %88 = vmatpush1.msra.mxu0 0.0
    %89 = vmatprep.subr.mxu0 0.0
    %90 = vmatpush1.msra.mxu0 0.0
    %91 = vmatprep.subr.mxu0 0.0
    %92 = vmatpush1.msra.mxu0 0.0
    %93 = vmatprep.subr.mxu0 0.0
    %94 = vmatpush1.msra.mxu0 0.0
    %95 = vmatprep.subr.mxu0 0.0
    %96 = vmatpush1.msra.mxu0 0.0
    %97 = vmatprep.subr.mxu0 0.0
    %98 = vmatpush1.msra.mxu0 0.0
    %99 = vmatprep.subr.mxu0 0.0
    %100 = vmatpush1.msra.mxu0 0.0
    %101 = vmatprep.mubr.f32.mxu0 0.0
    %102 = vmatmul.mubr.f32.gmra.mrb[0].mxu0 %v32
    %v103 = vpop.f32.mrb[0].mxu0
    %v104 = vadd.f32 0.0, %v103
    %v105 = vpop.f32.mrb[0].mxu0
    %106 = vmatprep.mubr.f32.mxu0 0.0
    %107 = vmatmul.mubr.f32.gmra.mrb[0].mxu0 %v35
    %v108 = vpop.f32.mrb[0].mxu0
    %v109 = vadd.f32 0.0, %v108
    %v110 = vpop.f32.mrb[0].mxu0
    %111 = vdwg.mxu0
    %v112 = vadd.f32 %v22, %v104
    %v113 = vadd.f32 %v23, %v109
    %114 = vst.msk [vmem:[#allocation2] sm:$0xff] %vm30, %v112
    %115 = vst.msk [vmem:[#allocation2 + $0x8] sm:$0xff] %vm30, %v113
    // Predicated region
    $region18: #{efficient_mha.5} parent=1 // pred_check
      %p116 = pneg %p15
    $region19: #{efficient_mha.5} parent=1 // pred_check_branch
      %118 = sbr.rel (%p116) target = $region21
    $region20: #{efficient_mha.5} parent=1 // pred_region
      %v119 = vld [vmem:[#allocation2] sm:$0xff]
      %v120 = vld [vmem:[#allocation2 + $0x8] sm:$0xff]
      %v121 = vld [vmem:[%s2] sm:$0x1]
      %v123 = vlaneseq
      %v124 = vshrl.u32 %v123, 7
      %v125 = vsub.s32 0, %v124
      %v126 = vrot.slane %v121, %v125
      %v128 = vadd.f32 %v119, %v126
      %v129 = vadd.f32 %v120, %v126
      %130 = vst.msk [vmem:[#allocation3] sm:$0xff] %vm30, %v128
      %131 = vst.msk [vmem:[#allocation3 + $0x8] sm:$0xff] %vm30, %v129
    $region21: #{efficient_mha.5} parent=1 // pred_fallthru
      _
    // Predicated region
    $region22: #{efficient_mha.5} parent=1 // pred_check
      _
    $region23: #{efficient_mha.5} parent=1 // pred_check_branch
      %133 = sbr.rel (0) target = $region25
    $region24: #{efficient_mha.5} parent=1 // pred_region
      %s135 = ssub.s32 256, 256
      %136 = vsyncadd [#allocation4], %s135
      %s137 = sshll.u32 [#allocation3], 4
      %s138 = int_to_ptr.vmem [resolvable:$true] %s137
      %143 = dma.vmem_to_hbm [thread:$0]  %s138, 256, %s3, [#allocation4], 128, 128, 8
    $region25: #{efficient_mha.5} parent=1 // pred_fallthru
      _
    // Predicated region
    $region26: #{efficient_mha.5} parent=1 // pred_check
      _
    $region27: #{efficient_mha.5} parent=1 // pred_check_branch
      %145 = sbr.rel (0) target = $region29
    $region28: #{efficient_mha.5} parent=1 // pred_region
      %146 = dma.done [#allocation4], 256
    $region29: #{efficient_mha.5} parent=1 // pred_fallthru
      _
    %147 = vsyncpa [#allocation4], 1

// kernel: efficient_mha.4
$region0: #{efficient_mha.4}
  #allocation0 [shape = 'u32[]', space=smem, size = 0x4, offset = 0x4, fixed_abs, tag = 'smem constant byte address 0x4 - core index']
  #allocation1 [shape = 'u32[144,128]{1,0:T(1,128)}', space=vmem, size = 0x12000, scoped, tag = 'internal scratch']
  #allocation2 [shape = 'f32[2,8,1]{2,1,0:T(8,128)}', space=vmem, size = 0x2000, scoped, tag = 'scratch operand']
  #allocation3 [shape = 'f32[2,8,1]{2,1,0:T(8,128)}', space=vmem, size = 0x2000, scoped, tag = 'scratch operand']
  #allocation4 [shape = 'f32[2,8,16]{2,1,0:T(8,128)}', space=vmem, size = 0x2000, scoped, tag = 'scratch operand']
  %s0 = inlined_call_operand.vmem [shape: f32[4,8,16], index: 0, kind: input, shape index: {}]
  %s1 = inlined_call_operand.vmem [shape: f32[4,8,16], index: 1, kind: input, shape index: {}]
  %s2 = inlined_call_operand.vmem [shape: f32[4,8,16], index: 2, kind: input, shape index: {}]
  %s3 = inlined_call_operand.vmem [shape: f32[4,8,16], index: 3, kind: output, shape index: {}]
  %s4 = sld [smem:[#allocation0]]
  $region53: #{efficient_mha.4} parent=0
    _
  %s6 = ssub.s32 1, %s4
  %s7 = scalar_select 0, %s6, %s4
  loop: start=0, step=1, limit=4
  $region2: #{efficient_mha.4} parent=0 // loop_pre_header
    _
  $region3: #{efficient_mha.4} parent=0 // loop_header
    %s9 = sphi 0, %s13
    %p10 = scmp.ge.s32.totalorder %s9, 4
    %s16 = sphi 0, %s35
    %s17 = sphi 0, %s31
    %s18 = sphi 0, %s27
    %s19 = sphi 0, %s16
    %s20 = sphi 0, %s17
    %s21 = sphi 0, %s18
    %s22 = sphi 0, %s19
    %s23 = sphi 0, %s20
    %s24 = sphi 0, %s21
    %s40 = sphi 0, %s42
    %s43 = sphi 0, %s40
    %s44 = sphi 0, %s43
    %s60 = sphi 0, %s44
    %s68 = sphi 0, %s70
    %s71 = sphi 0, %s68
    %s72 = sphi 0, %s71
    %s88 = sphi 0, %s72
    %s96 = sphi 0, %s98
    %s99 = sphi 0, %s96
    %s100 = sphi 0, %s99
    %s116 = sphi 0, %s100
    %s124 = sphi 0, %s126
    %s127 = sphi 0, %s124
    %s128 = sphi 0, %s127
    %s144 = sphi 0, %s128
  $region4: #{efficient_mha.4} parent=0 // loop_header_branch
    %12 = sbr.rel (%p10) target = $region8
  $region5: #{efficient_mha.4} parent=0 // loop_body
    %s14 = ssub.s32 %s9, 1
    %s15 = ssub.s32 %s9, 2
    %s25 = sadd.s32 1, %s18
    %p26 = scmp.ge.s32.totalorder %s25, 1
    %s27 = scalar_select %p26, 0, %s25
    %s28 = sadd.s32 1, %s17
    %s29 = scalar_select %p26, %s28, %s17
    %p30 = scmp.ge.s32.totalorder %s29, 1
    %s31 = scalar_select %p30, 0, %s29
    %s32 = sadd.s32 1, %s16
    %s33 = scalar_select %p30, %s32, %s16
    %p34 = scmp.ge.s32.totalorder %s33, 2
    %s35 = scalar_select %p34, 0, %s33
    %s36 = ssub.s32 %s16, %s35
    %s37 = ssub.s32 %s17, %s31
    %s38 = sor.u32 %s36, %s37
    %p39 = scmp.eq.s32.totalorder %s38, 0
    %s41 = sadd.s32 %s40, 1
    %s42 = scalar_select %p39, %s40, %s41
    %p45 = pneg %p39
    %p46 = scmp.eq.s32.totalorder %s9, 1
    %p47 = por %p45, %p46
    %p48 = scmp.ne.s32.totalorder %s40, %s43
    %p49 = scmp.eq.s32.totalorder %s9, 0
    %p50 = por %p48, %p49
    %p51 = scmp.ne.s32.totalorder %s40, %s43
    %p52 = scmp.eq.s32.totalorder %s14, 1
    %p53 = por %p51, %p52
    %p54 = scmp.ne.s32.totalorder %s43, %s44
    %p55 = scmp.eq.s32.totalorder %s14, 0
    %p56 = por %p54, %p55
    %p57 = scmp.ne.s32.totalorder %s43, %s44
    %p58 = scmp.eq.s32.totalorder %s15, 1
    %p59 = por %p57, %p58
    %p61 = scmp.ne.s32.totalorder %s44, %s60
    %p62 = scmp.eq.s32.totalorder %s15, 0
    %p63 = por %p61, %p62
    %s64 = ssub.s32 %s16, %s35
    %s65 = ssub.s32 %s18, %s27
    %s66 = sor.u32 %s64, %s65
    %p67 = scmp.eq.s32.totalorder %s66, 0
    %s69 = sadd.s32 %s68, 1
    %s70 = scalar_select %p67, %s68, %s69
    %p73 = pneg %p67
    %p74 = scmp.eq.s32.totalorder %s9, 1
    %p75 = por %p73, %p74
    %p76 = scmp.ne.s32.totalorder %s68, %s71
    %p77 = scmp.eq.s32.totalorder %s9, 0
    %p78 = por %p76, %p77
    %p79 = scmp.ne.s32.totalorder %s68, %s71
    %p80 = scmp.eq.s32.totalorder %s14, 1
    %p81 = por %p79, %p80
    %p82 = scmp.ne.s32.totalorder %s71, %s72
    %p83 = scmp.eq.s32.totalorder %s14, 0
    %p84 = por %p82, %p83
    %p85 = scmp.ne.s32.totalorder %s71, %s72
    %p86 = scmp.eq.s32.totalorder %s15, 1
    %p87 = por %p85, %p86
    %p89 = scmp.ne.s32.totalorder %s72, %s88
    %p90 = scmp.eq.s32.totalorder %s15, 0
    %p91 = por %p89, %p90
    %s92 = ssub.s32 %s16, %s35
    %s93 = ssub.s32 %s18, %s27
    %s94 = sor.u32 %s92, %s93
    %p95 = scmp.eq.s32.totalorder %s94, 0
    %s97 = sadd.s32 %s96, 1
    %s98 = scalar_select %p95, %s96, %s97
    %p101 = pneg %p95
    %p102 = scmp.eq.s32.totalorder %s9, 1
    %p103 = por %p101, %p102
    %p104 = scmp.ne.s32.totalorder %s96, %s99
    %p105 = scmp.eq.s32.totalorder %s9, 0
    %p106 = por %p104, %p105
    %p107 = scmp.ne.s32.totalorder %s96, %s99
    %p108 = scmp.eq.s32.totalorder %s14, 1
    %p109 = por %p107, %p108
    %p110 = scmp.ne.s32.totalorder %s99, %s100
    %p111 = scmp.eq.s32.totalorder %s14, 0
    %p112 = por %p110, %p111
    %p113 = scmp.ne.s32.totalorder %s99, %s100
    %p114 = scmp.eq.s32.totalorder %s15, 1
    %p115 = por %p113, %p114
    %p117 = scmp.ne.s32.totalorder %s100, %s116
    %p118 = scmp.eq.s32.totalorder %s15, 0
    %p119 = por %p117, %p118
    %s120 = ssub.s32 %s16, %s35
    %s121 = ssub.s32 %s17, %s31
    %s122 = sor.u32 %s120, %s121
    %p123 = scmp.eq.s32.totalorder %s122, 0
    %s125 = sadd.s32 %s124, 1
    %s126 = scalar_select %p123, %s124, %s125
    %p129 = pneg %p123
    %p130 = scmp.eq.s32.totalorder %s9, 1
    %p131 = por %p129, %p130
    %p132 = scmp.ne.s32.totalorder %s124, %s127
    %p133 = scmp.eq.s32.totalorder %s9, 0
    %p134 = por %p132, %p133
    %p135 = scmp.ne.s32.totalorder %s124, %s127
    %p136 = scmp.eq.s32.totalorder %s14, 1
    %p137 = por %p135, %p136
    %p138 = scmp.ne.s32.totalorder %s127, %s128
    %p139 = scmp.eq.s32.totalorder %s14, 0
    %p140 = por %p138, %p139
    %p141 = scmp.ne.s32.totalorder %s127, %s128
    %p142 = scmp.eq.s32.totalorder %s15, 1
    %p143 = por %p141, %p142
    %p145 = scmp.ne.s32.totalorder %s128, %s144
    %p146 = scmp.eq.s32.totalorder %s15, 0
    %p147 = por %p145, %p146
    %p148 = scmp.le.s32.totalorder 1, %s9
    %p149 = scmp.lt.s32.totalorder %s9, 3
    %p150 = pnand %p148, %p149
    %p151 = pneg %p150
    // Predicated region
    $region9: #{efficient_mha.4} parent=5 // pred_check
      _
    $region10: #{efficient_mha.4} parent=5 // pred_check_branch
      %153 = sbr.rel (%p150) target = $region12
    $region11: #{efficient_mha.4} parent=5 // pred_region
      %s154 = ssub.s32 %s9, 1
    $region12: #{efficient_mha.4} parent=5 // pred_fallthru
      _
    %p155 = scmp.lt.s32.totalorder %s9, 2
    // Predicated region
    $region13: #{efficient_mha.4} parent=5 // pred_check
      %p156 = pneg %p155
    $region14: #{efficient_mha.4} parent=5 // pred_check_branch
      %158 = sbr.rel (%p156) target = $region16
    $region15: #{efficient_mha.4} parent=5 // pred_region
      // Predicated region
      $region17: #{efficient_mha.4} parent=15 // pred_check
        %p159 = pneg %p50
      $region18: #{efficient_mha.4} parent=15 // pred_check_branch
        %161 = sbr.rel (%p159) target = $region20
      $region19: #{efficient_mha.4} parent=15 // pred_region
        %s162 = smul.u32 2, %s16
        %p163 = scmp.lt.s32.totalorder %s162, 3
        %s164 = scalar_select %p163, %s162, 3
        %p165 = scmp.lt.s32.totalorder %s17, 0
        %s166 = scalar_select %p165, %s17, 0
        %s167 = sadd.s32 %s166, %s164
        %s168 = smul.addr %s167, 8
        %s169 = scalar_lea.vmem %s0, %s168
        %s170 = smul.u32 2, %s16
      $region20: #{efficient_mha.4} parent=15 // pred_fallthru
        _
      // Predicated region
      $region21: #{efficient_mha.4} parent=15 // pred_check
        %p171 = pneg %p78
      $region22: #{efficient_mha.4} parent=15 // pred_check_branch
        %173 = sbr.rel (%p171) target = $region24
      $region23: #{efficient_mha.4} parent=15 // pred_region
        %s174 = smul.u32 2, %s16
        %p175 = scmp.lt.s32.totalorder %s174, 3
        %s176 = scalar_select %p175, %s174, 3
        %p177 = scmp.lt.s32.totalorder %s18, 0
        %s178 = scalar_select %p177, %s18, 0
        %s179 = sadd.s32 %s178, %s176
        %s180 = smul.addr %s179, 8
        %s181 = scalar_lea.vmem %s1, %s180
        %s182 = smul.u32 2, %s16
      $region24: #{efficient_mha.4} parent=15 // pred_fallthru
        _
      // Predicated region
      $region25: #{efficient_mha.4} parent=15 // pred_check
        %p183 = pneg %p106
      $region26: #{efficient_mha.4} parent=15 // pred_check_branch
        %185 = sbr.rel (%p183) target = $region28
      $region27: #{efficient_mha.4} parent=15 // pred_region
        %s186 = smul.u32 2, %s16
        %p187 = scmp.lt.s32.totalorder %s186, 3
        %s188 = scalar_select %p187, %s186, 3
        %p189 = scmp.lt.s32.totalorder %s18, 0
        %s190 = scalar_select %p189, %s18, 0
        %s191 = sadd.s32 %s190, %s188
        %s192 = smul.addr %s191, 8
        %s193 = scalar_lea.vmem %s2, %s192
        %s194 = smul.u32 2, %s16
      $region28: #{efficient_mha.4} parent=15 // pred_fallthru
        _
    $region16: #{efficient_mha.4} parent=5 // pred_fallthru
      _
    %p195 = scmp.le.s32.totalorder 1, %s9
    %p196 = scmp.lt.s32.totalorder %s9, 3
    %p197 = pnand %p195, %p196
    %p198 = pneg %p197
    // Predicated region
    $region29: #{efficient_mha.4} parent=5 // pred_check
      _
    $region30: #{efficient_mha.4} parent=5 // pred_check_branch
      %200 = sbr.rel (%p197) target = $region32
    $region31: #{efficient_mha.4} parent=5 // pred_region
      %s201 = ssub.s32 %s9, 1
      %s202 = smul.u32 2, %s19
      %p203 = scmp.lt.s32.totalorder %s202, 3
      %s204 = scalar_select %p203, %s202, 3
      %p205 = scmp.lt.s32.totalorder %s20, 0
      %s206 = scalar_select %p205, %s20, 0
      %s207 = sadd.s32 %s206, %s204
      %s208 = smul.addr %s207, 8
      %s209 = scalar_lea.vmem %s0, %s208
      %p210 = pneg %p56
      %p211 = pneg %p53
      %s212 = smul.u32 2, %s19
      %p213 = scmp.lt.s32.totalorder %s212, 3
      %s214 = scalar_select %p213, %s212, 3
      %p215 = scmp.lt.s32.totalorder %s21, 0
      %s216 = scalar_select %p215, %s21, 0
      %s217 = sadd.s32 %s216, %s214
      %s218 = smul.addr %s217, 8
      %s219 = scalar_lea.vmem %s1, %s218
      %p220 = pneg %p84
      %p221 = pneg %p81
      %s222 = smul.u32 2, %s19
      %p223 = scmp.lt.s32.totalorder %s222, 3
      %s224 = scalar_select %p223, %s222, 3
      %p225 = scmp.lt.s32.totalorder %s21, 0
      %s226 = scalar_select %p225, %s21, 0
      %s227 = sadd.s32 %s226, %s224
      %s228 = smul.addr %s227, 8
      %s229 = scalar_lea.vmem %s2, %s228
      %p230 = pneg %p112
      %p231 = pneg %p109
      %p232 = pneg %p140
      %p233 = pneg %p137
      %s234 = smul.u32 2, %s19
      %p235 = scmp.lt.s32.totalorder %s234, 3
      %s236 = scalar_select %p235, %s234, 3
      %p237 = scmp.lt.s32.totalorder %s20, 0
      %s238 = scalar_select %p237, %s20, 0
      %s239 = sadd.s32 %s238, %s236
      %s240 = smul.addr %s239, 8
      %s241 = scalar_lea.vmem %s3, %s240
      %s242 = smul.u32 2, %s19
      %p243 = scmp.lt.s32.totalorder %s242, 3
      %s244 = scalar_select %p243, %s242, 3
      %p245 = scmp.lt.s32.totalorder %s20, 0
      %s246 = scalar_select %p245, %s20, 0
      %s247 = sadd.s32 %s246, %s244
      %s248 = smul.addr %s247, 8
      %s249 = scalar_lea.vmem %s0, %s248
      %s250 = smul.u32 2, %s19
      %s251 = smul.u32 2, %s19
      %p252 = scmp.lt.s32.totalorder %s251, 3
      %s253 = scalar_select %p252, %s251, 3
      %p254 = scmp.lt.s32.totalorder %s21, 0
      %s255 = scalar_select %p254, %s21, 0
      %s256 = sadd.s32 %s255, %s253
      %s257 = smul.addr %s256, 8
      %s258 = scalar_lea.vmem %s1, %s257
      %s259 = smul.u32 2, %s19
      %s260 = smul.u32 2, %s19
      %p261 = scmp.lt.s32.totalorder %s260, 3
      %s262 = scalar_select %p261, %s260, 3
      %p263 = scmp.lt.s32.totalorder %s21, 0
      %s264 = scalar_select %p263, %s21, 0
      %s265 = sadd.s32 %s264, %s262
      %s266 = smul.addr %s265, 8
      %s267 = scalar_lea.vmem %s2, %s266
      %s268 = smul.u32 2, %s19
      %s269 = smul.u32 2, %s19
      %p270 = scmp.lt.s32.totalorder %s269, 3
      %s271 = scalar_select %p270, %s269, 3
      %p272 = scmp.lt.s32.totalorder %s20, 0
      %s273 = scalar_select %p272, %s20, 0
      %s274 = sadd.s32 %s273, %s271
      %s275 = smul.addr %s274, 8
      %s276 = scalar_lea.vmem %s3, %s275
      %s277 = smul.u32 2, %s19
      %p278 = scmp.eq.s32.totalorder %s21, 0
      // Predicated region
      $region33: #{efficient_mha.4} parent=31 // pred_check
        %p279 = pneg %p278
      $region34: #{efficient_mha.4} parent=31 // pred_check_branch
        %281 = sbr.rel (%p279) target = $region36
      $region35: #{efficient_mha.4} parent=31 // pred_region
        %vm282 = vcmask 7168
        %283 = vst.msk [vmem:[#allocation2] sm:$0xff] %vm282, -inf
        %284 = vst.msk [vmem:[#allocation2 + $0x8] sm:$0xff] %vm282, -inf
        %285 = vst.msk [vmem:[#allocation3] sm:$0xff] %vm282, 0.0
        %286 = vst.msk [vmem:[#allocation3 + $0x8] sm:$0xff] %vm282, 0.0
        %vm287 = vcmask 130048
        %288 = vst.msk [vmem:[#allocation4] sm:$0xff] %vm287, 0.0
        %289 = vst.msk [vmem:[#allocation4 + $0x8] sm:$0xff] %vm287, 0.0
      $region36: #{efficient_mha.4} parent=31 // pred_fallthru
        _
      %v290 = vld [vmem:[%s249] sm:$0xff]
      %v291 = vld [vmem:[%s249 + $0x8] sm:$0xff]
      %v292 = vmul.f32 %v290, 0.25
      %v293 = vmul.f32 %v291, 0.25
      %v294 = vld [vmem:[%s258] sm:$0xff]
      %v295 = vld [vmem:[%s258 + $0x8] sm:$0xff]
      %vm296 = vcmask 130048
      %v298 = vsel %vm296, %v292, 0
      %v301 = vsel %vm296, %v294, 0
      %303 = vmatprep.subr.mxu0 0.0
      %304 = vmatpush1.xpose.msra.mxu0 %v301
      %305 = vmatprep.subr.mxu0 0.0
      %306 = vmatpush1.xpose.msra.mxu0 0.0
      %307 = vmatprep.subr.mxu0 0.0
      %308 = vmatpush1.xpose.msra.mxu0 0.0
      %309 = vmatprep.subr.mxu0 0.0
      %310 = vmatpush1.xpose.msra.mxu0 0.0
      %311 = vmatprep.subr.mxu0 0.0
      %312 = vmatpush1.xpose.msra.mxu0 0.0
      %313 = vmatprep.subr.mxu0 0.0
      %314 = vmatpush1.xpose.msra.mxu0 0.0
      %315 = vmatprep.subr.mxu0 0.0
      %316 = vmatpush1.xpose.msra.mxu0 0.0
      %317 = vmatprep.subr.mxu0 0.0
      %318 = vmatpush1.xpose.msra.mxu0 0.0
      %319 = vmatprep.subr.mxu0 0.0
      %320 = vmatpush1.xpose.msra.mxu0 0.0
      %321 = vmatprep.subr.mxu0 0.0
      %322 = vmatpush1.xpose.msra.mxu0 0.0
      %323 = vmatprep.subr.mxu0 0.0
      %324 = vmatpush1.xpose.msra.mxu0 0.0
      %325 = vmatprep.subr.mxu0 0.0
      %326 = vmatpush1.xpose.msra.mxu0 0.0
      %327 = vmatprep.subr.mxu0 0.0
      %328 = vmatpush1.xpose.msra.mxu0 0.0
      %329 = vmatprep.subr.mxu0 0.0
      %330 = vmatpush1.xpose.msra.mxu0 0.0
      %331 = vmatprep.subr.mxu0 0.0
      %332 = vmatpush1.xpose.msra.mxu0 0.0
      %333 = vmatprep.subr.mxu0 0.0
      %334 = vmatpush1.xpose.msra.mxu0 0.0
      %335 = vmatprep.subr.mxu0 0.0
      %336 = vmatpush1.xpose.msra.mxu0 0.0
      %337 = vmatprep.subr.mxu0 0.0
      %338 = vmatpush1.xpose.msra.mxu0 0.0
      %339 = vmatprep.subr.mxu0 0.0
      %340 = vmatpush1.xpose.msra.mxu0 0.0
      %341 = vmatprep.subr.mxu0 0.0
      %342 = vmatpush1.xpose.msra.mxu0 0.0
      %343 = vmatprep.subr.mxu0 0.0
      %344 = vmatpush1.xpose.msra.mxu0 0.0
      %345 = vmatprep.subr.mxu0 0.0
      %346 = vmatpush1.xpose.msra.mxu0 0.0
      %347 = vmatprep.subr.mxu0 0.0
      %348 = vmatpush1.xpose.msra.mxu0 0.0
      %349 = vmatprep.subr.mxu0 0.0
      %350 = vmatpush1.xpose.msra.mxu0 0.0
      %351 = vmatprep.subr.mxu0 0.0
      %352 = vmatpush1.xpose.msra.mxu0 0.0
      %353 = vmatprep.subr.mxu0 0.0
      %354 = vmatpush1.xpose.msra.mxu0 0.0
      %355 = vmatprep.subr.mxu0 0.0
      %356 = vmatpush1.xpose.msra.mxu0 0.0
      %357 = vmatprep.subr.mxu0 0.0
      %358 = vmatpush1.xpose.msra.mxu0 0.0
      %359 = vmatprep.subr.mxu0 0.0
      %360 = vmatpush1.xpose.msra.mxu0 0.0
      %361 = vmatprep.subr.mxu0 0.0
      %362 = vmatpush1.xpose.msra.mxu0 0.0
      %363 = vmatprep.subr.mxu0 0.0
      %364 = vmatpush1.xpose.msra.mxu0 0.0
      %365 = vmatprep.subr.mxu0 0.0
      %366 = vmatpush1.xpose.msra.mxu0 0.0
      %367 = vmatprep.mubr.f32.mxu0 0.0
      %368 = vmatmul.mubr.f32.gmra.mrb[0].mxu0 %v298
      %v369 = vpop.f32.mrb[0].mxu0
      %v370 = vadd.f32 0.0, %v369
      %v371 = vpop.f32.mrb[0].mxu0
      %372 = vdwg.mxu0
      %v374 = vsel %vm296, %v293, 0
      %v377 = vsel %vm296, %v295, 0
      %379 = vmatprep.subr.mxu0 0.0
      %380 = vmatpush1.xpose.msra.mxu0 %v377
      %381 = vmatprep.subr.mxu0 0.0
      %382 = vmatpush1.xpose.msra.mxu0 0.0
      %383 = vmatprep.subr.mxu0 0.0
      %384 = vmatpush1.xpose.msra.mxu0 0.0
      %385 = vmatprep.subr.mxu0 0.0
      %386 = vmatpush1.xpose.msra.mxu0 0.0
      %387 = vmatprep.subr.mxu0 0.0
      %388 = vmatpush1.xpose.msra.mxu0 0.0
      %389 = vmatprep.subr.mxu0 0.0
      %390 = vmatpush1.xpose.msra.mxu0 0.0
      %391 = vmatprep.subr.mxu0 0.0
      %392 = vmatpush1.xpose.msra.mxu0 0.0
      %393 = vmatprep.subr.mxu0 0.0
      %394 = vmatpush1.xpose.msra.mxu0 0.0
      %395 = vmatprep.subr.mxu0 0.0
      %396 = vmatpush1.xpose.msra.mxu0 0.0
      %397 = vmatprep.subr.mxu0 0.0
      %398 = vmatpush1.xpose.msra.mxu0 0.0
      %399 = vmatprep.subr.mxu0 0.0
      %400 = vmatpush1.xpose.msra.mxu0 0.0
      %401 = vmatprep.subr.mxu0 0.0
      %402 = vmatpush1.xpose.msra.mxu0 0.0
      %403 = vmatprep.subr.mxu0 0.0
      %404 = vmatpush1.xpose.msra.mxu0 0.0
      %405 = vmatprep.subr.mxu0 0.0
      %406 = vmatpush1.xpose.msra.mxu0 0.0
      %407 = vmatprep.subr.mxu0 0.0
      %408 = vmatpush1.xpose.msra.mxu0 0.0
      %409 = vmatprep.subr.mxu0 0.0
      %410 = vmatpush1.xpose.msra.mxu0 0.0
      %411 = vmatprep.subr.mxu0 0.0
      %412 = vmatpush1.xpose.msra.mxu0 0.0
      %413 = vmatprep.subr.mxu0 0.0
      %414 = vmatpush1.xpose.msra.mxu0 0.0
      %415 = vmatprep.subr.mxu0 0.0
      %416 = vmatpush1.xpose.msra.mxu0 0.0
      %417 = vmatprep.subr.mxu0 0.0
      %418 = vmatpush1.xpose.msra.mxu0 0.0
      %419 = vmatprep.subr.mxu0 0.0
      %420 = vmatpush1.xpose.msra.mxu0 0.0
      %421 = vmatprep.subr.mxu0 0.0
      %422 = vmatpush1.xpose.msra.mxu0 0.0
      %423 = vmatprep.subr.mxu0 0.0
      %424 = vmatpush1.xpose.msra.mxu0 0.0
      %425 = vmatprep.subr.mxu0 0.0
      %426 = vmatpush1.xpose.msra.mxu0 0.0
      %427 = vmatprep.subr.mxu0 0.0
      %428 = vmatpush1.xpose.msra.mxu0 0.0
      %429 = vmatprep.subr.mxu0 0.0
      %430 = vmatpush1.xpose.msra.mxu0 0.0
      %431 = vmatprep.subr.mxu0 0.0
      %432 = vmatpush1.xpose.msra.mxu0 0.0
      %433 = vmatprep.subr.mxu0 0.0
      %434 = vmatpush1.xpose.msra.mxu0 0.0
      %435 = vmatprep.subr.mxu0 0.0
      %436 = vmatpush1.xpose.msra.mxu0 0.0
      %437 = vmatprep.subr.mxu0 0.0
      %438 = vmatpush1.xpose.msra.mxu0 0.0
      %439 = vmatprep.subr.mxu0 0.0
      %440 = vmatpush1.xpose.msra.mxu0 0.0
      %441 = vmatprep.subr.mxu0 0.0
      %442 = vmatpush1.xpose.msra.mxu0 0.0
      %443 = vmatprep.mubr.f32.mxu0 0.0
      %444 = vmatmul.mubr.f32.gmra.mrb[0].mxu0 %v374
      %v445 = vpop.f32.mrb[0].mxu0
      %v446 = vadd.f32 0.0, %v445
      %v447 = vpop.f32.mrb[0].mxu0
      %448 = vdwg.mxu0
      %v449 = vld [vmem:[#allocation2] sm:$0xff]
      %v450 = vld [vmem:[#allocation2 + $0x8] sm:$0xff]
      %vm451 = vcmask 64512
      %v452 = vsel %vm451, %v370, -inf
      %453 = vmax.xlane.f32.xlu0 %v452
      %v454 = vpop.xlane.xlu0 %453
      %v455 = vsel %vm451, %v446, -inf
      %456 = vmax.xlane.f32.xlu0 %v455
      %v457 = vpop.xlane.xlu0 %456
      %v458 = vmax.f32 %v449, %v454
      %v459 = vmax.f32 %v450, %v457
      %v460 = vsub.f32 %v449, %v458
      %v461 = vsub.f32 %v450, %v459
      %v462 = vmul.f32 %v460, 1.442695
      %v463 = vpow.pop %v462
      %v464 = vmul.f32 %v461, 1.442695
      %v465 = vpow.pop %v464
      %467 = vset.pattern.permute.xlu0 0
      %468 = vperm.xlu0 %467, %v458
      %v469 = vpop.permute.xlu0 %468
      %472 = vset.pattern.permute.xlu0 0
      %473 = vperm.xlu0 %472, %v459
      %v474 = vpop.permute.xlu0 %473
      %v476 = vsub.f32 %v370, %v469
      %v477 = vsub.f32 %v446, %v474
      %v478 = vmul.f32 %v476, 1.442695
      %v479 = vpow.pop %v478
      %v480 = vmul.f32 %v477, 1.442695
      %v481 = vpow.pop %v480
      %v482 = vld [vmem:[#allocation3] sm:$0xff]
      %v483 = vld [vmem:[#allocation3 + $0x8] sm:$0xff]
      %v484 = vmul.f32 %v463, %v482
      %v485 = vmul.f32 %v465, %v483
      %v486 = vsel %vm451, %v479, 0.0
      %487 = vadd.xlane.f32.xlu0 %v486
      %v488 = vpop.xlane.xlu0 %487
      %v489 = vsel %vm451, %v481, 0.0
      %490 = vadd.xlane.f32.xlu0 %v489
      %v491 = vpop.xlane.xlu0 %490
      %v492 = vadd.f32 %v484, %v488
      %v493 = vadd.f32 %v485, %v491
      %vm494 = vcmask 7168
      %495 = vst.msk [vmem:[#allocation3] sm:$0xff] %vm494, %v492
      %496 = vst.msk [vmem:[#allocation3 + $0x8] sm:$0xff] %vm494, %v493
      %v497 = vld [vmem:[#allocation4] sm:$0xff]
      %v498 = vld [vmem:[#allocation4 + $0x8] sm:$0xff]
      %500 = vset.pattern.permute.xlu0 0
      %501 = vperm.xlu0 %500, %v463
      %v502 = vpop.permute.xlu0 %501
      %505 = vset.pattern.permute.xlu0 0
      %506 = vperm.xlu0 %505, %v465
      %v507 = vpop.permute.xlu0 %506
      %v509 = vmul.f32 %v502, %v497
      %v510 = vmul.f32 %v507, %v498
      %v511 = vld [vmem:[%s267] sm:$0xff]
      %v512 = vld [vmem:[%s267 + $0x8] sm:$0xff]
      %v514 = vsel %vm451, %v479, 0
      %516 = vmatprep.subr.mxu0 0.0
      %517 = vmatpush1.msra.mxu0 %v511
      %518 = vmatprep.subr.mxu0 0.0
      %519 = vmatpush1.msra.mxu0 0.0
      %520 = vmatprep.subr.mxu0 0.0
      %521 = vmatpush1.msra.mxu0 0.0
      %522 = vmatprep.subr.mxu0 0.0
      %523 = vmatpush1.msra.mxu0 0.0
      %524 = vmatprep.subr.mxu0 0.0
      %525 = vmatpush1.msra.mxu0 0.0
      %526 = vmatprep.subr.mxu0 0.0
      %527 = vmatpush1.msra.mxu0 0.0
      %528 = vmatprep.subr.mxu0 0.0
      %529 = vmatpush1.msra.mxu0 0.0
      %530 = vmatprep.subr.mxu0 0.0
      %531 = vmatpush1.msra.mxu0 0.0
      %532 = vmatprep.subr.mxu0 0.0
      %533 = vmatpush1.msra.mxu0 0.0
      %534 = vmatprep.subr.mxu0 0.0
      %535 = vmatpush1.msra.mxu0 0.0
      %536 = vmatprep.subr.mxu0 0.0
      %537 = vmatpush1.msra.mxu0 0.0
      %538 = vmatprep.subr.mxu0 0.0
      %539 = vmatpush1.msra.mxu0 0.0
      %540 = vmatprep.subr.mxu0 0.0
      %541 = vmatpush1.msra.mxu0 0.0
      %542 = vmatprep.subr.mxu0 0.0
      %543 = vmatpush1.msra.mxu0 0.0
      %544 = vmatprep.subr.mxu0 0.0
      %545 = vmatpush1.msra.mxu0 0.0
      %546 = vmatprep.subr.mxu0 0.0
      %547 = vmatpush1.msra.mxu0 0.0
      %548 = vmatprep.subr.mxu0 0.0
      %549 = vmatpush1.msra.mxu0 0.0
      %550 = vmatprep.subr.mxu0 0.0
      %551 = vmatpush1.msra.mxu0 0.0
      %552 = vmatprep.subr.mxu0 0.0
      %553 = vmatpush1.msra.mxu0 0.0
      %554 = vmatprep.subr.mxu0 0.0
      %555 = vmatpush1.msra.mxu0 0.0
      %556 = vmatprep.subr.mxu0 0.0
      %557 = vmatpush1.msra.mxu0 0.0
      %558 = vmatprep.subr.mxu0 0.0
      %559 = vmatpush1.msra.mxu0 0.0
      %560 = vmatprep.subr.mxu0 0.0
      %561 = vmatpush1.msra.mxu0 0.0
      %562 = vmatprep.subr.mxu0 0.0
      %563 = vmatpush1.msra.mxu0 0.0
      %564 = vmatprep.subr.mxu0 0.0
      %565 = vmatpush1.msra.mxu0 0.0
      %566 = vmatprep.subr.mxu0 0.0
      %567 = vmatpush1.msra.mxu0 0.0
      %568 = vmatprep.subr.mxu0 0.0
      %569 = vmatpush1.msra.mxu0 0.0
      %570 = vmatprep.subr.mxu0 0.0
      %571 = vmatpush1.msra.mxu0 0.0
      %572 = vmatprep.subr.mxu0 0.0
      %573 = vmatpush1.msra.mxu0 0.0
      %574 = vmatprep.subr.mxu0 0.0
      %575 = vmatpush1.msra.mxu0 0.0
      %576 = vmatprep.subr.mxu0 0.0
      %577 = vmatpush1.msra.mxu0 0.0
      %578 = vmatprep.subr.mxu0 0.0
      %579 = vmatpush1.msra.mxu0 0.0
      %580 = vmatprep.mubr.f32.mxu0 0.0
      %581 = vmatmul.mubr.f32.gmra.mrb[0].mxu0 %v514
      %v582 = vpop.f32.mrb[0].mxu0
      %v583 = vadd.f32 0.0, %v582
      %v584 = vpop.f32.mrb[0].mxu0
      %585 = vdwg.mxu0
      %v587 = vsel %vm451, %v481, 0
      %589 = vmatprep.subr.mxu0 0.0
      %590 = vmatpush1.msra.mxu0 %v512
      %591 = vmatprep.subr.mxu0 0.0
      %592 = vmatpush1.msra.mxu0 0.0
      %593 = vmatprep.subr.mxu0 0.0
      %594 = vmatpush1.msra.mxu0 0.0
      %595 = vmatprep.subr.mxu0 0.0
      %596 = vmatpush1.msra.mxu0 0.0
      %597 = vmatprep.subr.mxu0 0.0
      %598 = vmatpush1.msra.mxu0 0.0
      %599 = vmatprep.subr.mxu0 0.0
      %600 = vmatpush1.msra.mxu0 0.0
      %601 = vmatprep.subr.mxu0 0.0
      %602 = vmatpush1.msra.mxu0 0.0
      %603 = vmatprep.subr.mxu0 0.0
      %604 = vmatpush1.msra.mxu0 0.0
      %605 = vmatprep.subr.mxu0 0.0
      %606 = vmatpush1.msra.mxu0 0.0
      %607 = vmatprep.subr.mxu0 0.0
      %608 = vmatpush1.msra.mxu0 0.0
      %609 = vmatprep.subr.mxu0 0.0
      %610 = vmatpush1.msra.mxu0 0.0
      %611 = vmatprep.subr.mxu0 0.0
      %612 = vmatpush1.msra.mxu0 0.0
      %613 = vmatprep.subr.mxu0 0.0
      %614 = vmatpush1.msra.mxu0 0.0
      %615 = vmatprep.subr.mxu0 0.0
      %616 = vmatpush1.msra.mxu0 0.0
      %617 = vmatprep.subr.mxu0 0.0
      %618 = vmatpush1.msra.mxu0 0.0
      %619 = vmatprep.subr.mxu0 0.0
      %620 = vmatpush1.msra.mxu0 0.0
      %621 = vmatprep.subr.mxu0 0.0
      %622 = vmatpush1.msra.mxu0 0.0
      %623 = vmatprep.subr.mxu0 0.0
      %624 = vmatpush1.msra.mxu0 0.0
      %625 = vmatprep.subr.mxu0 0.0
      %626 = vmatpush1.msra.mxu0 0.0
      %627 = vmatprep.subr.mxu0 0.0
      %628 = vmatpush1.msra.mxu0 0.0
      %629 = vmatprep.subr.mxu0 0.0
      %630 = vmatpush1.msra.mxu0 0.0
      %631 = vmatprep.subr.mxu0 0.0
      %632 = vmatpush1.msra.mxu0 0.0
      %633 = vmatprep.subr.mxu0 0.0
      %634 = vmatpush1.msra.mxu0 0.0
      %635 = vmatprep.subr.mxu0 0.0
      %636 = vmatpush1.msra.mxu0 0.0
      %637 = vmatprep.subr.mxu0 0.0
      %638 = vmatpush1.msra.mxu0 0.0
      %639 = vmatprep.subr.mxu0 0.0
      %640 = vmatpush1.msra.mxu0 0.0
      %641 = vmatprep.subr.mxu0 0.0
      %642 = vmatpush1.msra.mxu0 0.0
      %643 = vmatprep.subr.mxu0 0.0
      %644 = vmatpush1.msra.mxu0 0.0
      %645 = vmatprep.subr.mxu0 0.0
      %646 = vmatpush1.msra.mxu0 0.0
      %647 = vmatprep.subr.mxu0 0.0
      %648 = vmatpush1.msra.mxu0 0.0
      %649 = vmatprep.subr.mxu0 0.0
      %650 = vmatpush1.msra.mxu0 0.0
      %651 = vmatprep.subr.mxu0 0.0
      %652 = vmatpush1.msra.mxu0 0.0
      %653 = vmatprep.mubr.f32.mxu0 0.0
      %654 = vmatmul.mubr.f32.gmra.mrb[0].mxu0 %v587
      %v655 = vpop.f32.mrb[0].mxu0
      %v656 = vadd.f32 0.0, %v655
      %v657 = vpop.f32.mrb[0].mxu0
      %658 = vdwg.mxu0
      %v659 = vadd.f32 %v509, %v583
      %v660 = vadd.f32 %v510, %v656
      %661 = vst.msk [vmem:[#allocation4] sm:$0xff] %vm296, %v659
      %662 = vst.msk [vmem:[#allocation4 + $0x8] sm:$0xff] %vm296, %v660
      %663 = vst.msk [vmem:[#allocation2] sm:$0xff] %vm494, %v458
      %664 = vst.msk [vmem:[#allocation2 + $0x8] sm:$0xff] %vm494, %v459
      // Predicated region
      $region37: #{efficient_mha.4} parent=31 // pred_check
        %p665 = pneg %p278
      $region38: #{efficient_mha.4} parent=31 // pred_check_branch
        %667 = sbr.rel (%p665) target = $region40
      $region39: #{efficient_mha.4} parent=31 // pred_region
        %v668 = vld [vmem:[#allocation3] sm:$0xff]
        %v669 = vld [vmem:[#allocation3 + $0x8] sm:$0xff]
        %v670 = vrcp.pop %v668
        %v671 = vrcp.pop %v669
        %v672 = vld [vmem:[#allocation4] sm:$0xff]
        %v673 = vld [vmem:[#allocation4 + $0x8] sm:$0xff]
        %675 = vset.pattern.permute.xlu0 0
        %676 = vperm.xlu0 %675, %v670
        %v677 = vpop.permute.xlu0 %676
        %680 = vset.pattern.permute.xlu0 0
        %681 = vperm.xlu0 %680, %v671
        %v682 = vpop.permute.xlu0 %681
        %v684 = vmul.f32 %v672, %v677
        %v685 = vmul.f32 %v673, %v682
        %686 = vst.msk [vmem:[%s276] sm:$0xff] %vm296, %v684
        %687 = vst.msk [vmem:[%s276 + $0x8] sm:$0xff] %vm296, %v685
      $region40: #{efficient_mha.4} parent=31 // pred_fallthru
        _
      %s688 = smul.u32 2, %s19
      %p689 = scmp.lt.s32.totalorder %s688, 3
      %s690 = scalar_select %p689, %s688, 3
      %p691 = scmp.lt.s32.totalorder %s20, 0
      %s692 = scalar_select %p691, %s20, 0
      %s693 = sadd.s32 %s692, %s690
      %s694 = smul.addr %s693, 8
      %s695 = scalar_lea.vmem %s3, %s694
      // Predicated region
      $region41: #{efficient_mha.4} parent=31 // pred_check
        %p696 = pneg %p137
      $region42: #{efficient_mha.4} parent=31 // pred_check_branch
        %698 = sbr.rel (%p696) target = $region44
      $region43: #{efficient_mha.4} parent=31 // pred_region
        %s699 = smul.u32 2, %s19
      $region44: #{efficient_mha.4} parent=31 // pred_fallthru
        _
    $region32: #{efficient_mha.4} parent=5 // pred_fallthru
      _
    %p700 = scmp.le.s32.totalorder 2, %s9
    // Predicated region
    $region45: #{efficient_mha.4} parent=5 // pred_check
      %p701 = pneg %p700
    $region46: #{efficient_mha.4} parent=5 // pred_check_branch
      %703 = sbr.rel (%p701) target = $region48
    $region47: #{efficient_mha.4} parent=5 // pred_region
      %s704 = ssub.s32 %s9, 2
      // Predicated region
      $region49: #{efficient_mha.4} parent=47 // pred_check
        %p705 = pneg %p143
      $region50: #{efficient_mha.4} parent=47 // pred_check_branch
        %707 = sbr.rel (%p705) target = $region52
      $region51: #{efficient_mha.4} parent=47 // pred_region
        %s708 = smul.u32 2, %s22
        %p709 = scmp.lt.s32.totalorder %s708, 3
        %s710 = scalar_select %p709, %s708, 3
        %p711 = scmp.lt.s32.totalorder %s23, 0
        %s712 = scalar_select %p711, %s23, 0
        %s713 = sadd.s32 %s712, %s710
        %s714 = smul.addr %s713, 8
        %s715 = scalar_lea.vmem %s3, %s714
      $region52: #{efficient_mha.4} parent=47 // pred_fallthru
        _
    $region48: #{efficient_mha.4} parent=5 // pred_fallthru
      _
  $region6: #{efficient_mha.4} parent=0 // loop_footer
    %s13 = sadd.s32 1, %s9
  $region7: #{efficient_mha.4} parent=0 // loop_footer_branch
    %8 = sbr.rel target = $region3
  $region8: #{efficient_mha.4} parent=0 // loop_exit
    _

</llo_original>
